<compile_context>
chip_gen: v6e
topology: v6e:2x2x1
jax: 0.10.0
libtpu: 0.0.40
codegen_flags: <defaults>
</compile_context>

<pallas_src>
import functools

import jax
import jax.numpy as jnp
from jax import lax
from jax.experimental import pallas as pl
from jax.experimental.pallas import tpu as pltpu


# ------------------------------- fused Pallas kernel -------------------------------

def _unet_fused_kernel(xph_ref, w1_ref, b1_ref, w2_ref, b2_ref, wt_ref, bt_ref,
                       o_ref, pool_scr, a1_scr, im1_scr, im2_scr,
                       *, wp, lpix, c0, c1):
    f32 = jnp.float32
    hi = lax.Precision.HIGHEST
    shifts = tuple((t // 3) * wp + (t % 3) for t in range(9))   # 3x3 tap offsets

    # ---- Stage 0: 2x2 max-pool (phases de-interleaved in the wrapper) -- pure VPU.
    pooled = jnp.maximum(jnp.maximum(xph_ref[0], xph_ref[1]),
                         jnp.maximum(xph_ref[2], xph_ref[3]))             # (c0, lpix)

    # Zero only the pad columns of the two padded activation slabs. Valid output
    # positions never read pad columns (and never read across the batch seam),
    # so this is hygiene only; the data region [0:lpix] is always overwritten.
    pool_scr[:, lpix:] = jnp.zeros((c0, pool_scr.shape[1] - lpix), f32)
    a1_scr[:, lpix:] = jnp.zeros((c1, a1_scr.shape[1] - lpix), f32)
    pool_scr[:, 0:lpix] = pooled

    # ---- Stage 1: Conv2d(c0->c1, 3x3, VALID) + bias + ReLU as ONE MXU matmul.
    # Build the (9*c0, lpix) im2col with 9 sublane-block stores of lane-shifted
    # views of the padded pooled slab, then a single (c1, 9*c0)@(9*c0, lpix) dot.
    for t, sh in enumerate(shifts):
        im1_scr[t * c0:(t + 1) * c0, :] = pool_scr[:, sh:sh + lpix]
    a1 = jnp.maximum(
        jnp.dot(w1_ref[...], im1_scr[...],
                preferred_element_type=f32, precision=hi) + b1_ref[...], 0.0)
    a1_scr[:, 0:lpix] = a1                                                # (c1, lpix)

    # ---- Stage 2: Conv2d(c1->c2, 3x3, VALID) + bias + ReLU as ONE MXU matmul.
    for t, sh in enumerate(shifts):
        im2_scr[t * c1:(t + 1) * c1, :] = a1_scr[:, sh:sh + lpix]
    a2 = jnp.maximum(
        jnp.dot(w2_ref[...], im2_scr[...],
                preferred_element_type=f32, precision=hi) + b2_ref[...], 0.0)

    # ---- Stage 3: ConvTranspose2d(c2->c3, 2, stride=2): all 4 phases in ONE matmul.
    # Output slab is phase-major (4*c3, lpix); the tiny phase de-interleave is one
    # fused reshape/transpose in the wrapper (no 0/1 scatter matmuls).
    o_ref[...] = (jnp.dot(wt_ref[...], a2,
                          preferred_element_type=f32, precision=hi)
                  + bt_ref[...]).astype(o_ref.dtype)


# ------------------------------- param packing (init-time) -------------------------------

def pack_params(params):
    """Repack PyTorch-layout parameters once, outside the jitted forward."""
    w1, b1, w2, b2, wt, bt = params
    C1, C0 = w1.shape[0], w1.shape[1]
    C2 = w2.shape[0]
    C3 = wt.shape[1]
    # Conv taps folded into the contraction dim: (Cout, 9*Cin), tap-major.
    w1p = jnp.transpose(w1, (0, 2, 3, 1)).reshape(C1, 9 * C0)
    w2p = jnp.transpose(w2, (0, 2, 3, 1)).reshape(C2, 9 * C1)
    # ConvTranspose phases stacked on the output rows: (4*C3, C2), phase-major.
    wtp = jnp.transpose(wt, (2, 3, 1, 0)).reshape(4 * C3, C2)
    b1p = b1.reshape(C1, 1)
    b2p = b2.reshape(C2, 1)
    btp = jnp.tile(bt, 4).reshape(4 * C3, 1)
    return (w1p, b1p, w2p, b2p, wtp, btp)


# ------------------------------- forward wrapper -------------------------------

def unet_block_forward(x_nchw, packed):
    w1p, b1p, w2p, b2p, wtp, btp = packed
    N, C0, H, W = x_nchw.shape
    C1 = w1p.shape[0]
    C2 = w2p.shape[0]
    C3 = wtp.shape[0] // 4
    # NOTE: PyTorch ceil_mode=True MaxPool2d matters only for odd H/W; even here.
    # TODO(synk): handle odd spatial dims (ceil_mode padding) if ever needed.
    Hp, Wp = H // 2, W // 2
    npix = Hp * Wp
    Lpix = N * npix                      # batch folded into the lane axis
    Hc, Wc = Hp - 4, Wp - 4              # spatial after two 3x3 VALID convs
    Ho, Wo = 2 * Hc, 2 * Wc
    wpad = -(-(Lpix + 2 * Wp + 3) // 128) * 128   # padded slab width (>= Lpix + max shift)

    # Pool-phase de-interleave + batch-into-lanes: ONE fused XLA transpose.
    # xph[ph*2+pw, c, n*npix + i*Wp + j] = x[n, c, 2i+ph, 2j+pw]
    xph = (x_nchw.reshape(N, C0, Hp, 2, Wp, 2)
                 .transpose(3, 5, 1, 0, 2, 4)
                 .reshape(4, C0, Lpix))

    kern = functools.partial(_unet_fused_kernel, wp=Wp, lpix=Lpix, c0=C0, c1=C1)

    out_slab = pl.pallas_call(
        kern,
        out_shape=jax.ShapeDtypeStruct((4 * C3, Lpix), x_nchw.dtype),
        grid=(1,),
        in_specs=[
            pl.BlockSpec((4, C0, Lpix), lambda i: (0, 0, 0)),
            pl.BlockSpec((C1, 9 * C0), lambda i: (0, 0)),
            pl.BlockSpec((C1, 1), lambda i: (0, 0)),
            pl.BlockSpec((C2, 9 * C1), lambda i: (0, 0)),
            pl.BlockSpec((C2, 1), lambda i: (0, 0)),
            pl.BlockSpec((4 * C3, C2), lambda i: (0, 0)),
            pl.BlockSpec((4 * C3, 1), lambda i: (0, 0)),
        ],
        out_specs=pl.BlockSpec((4 * C3, Lpix), lambda i: (0, 0)),
        scratch_shapes=[
            pltpu.VMEM((C0, wpad), jnp.float32),       # padded pooled slab
            pltpu.VMEM((C1, wpad), jnp.float32),       # padded conv1 activation slab
            pltpu.VMEM((9 * C0, Lpix), jnp.float32),   # conv1 im2col
            pltpu.VMEM((9 * C1, Lpix), jnp.float32),   # conv2 im2col
        ],
        compiler_params=pltpu.CompilerParams(
            dimension_semantics=("arbitrary",),
        ),
    )(xph, w1p, b1p, w2p, b2p, wtp, btp)

    # Phase de-interleave + drop garbage columns: one fused XLA op on ~2 KiB.
    # slab[(kh*2+kw)*C3 + c, n*npix + i*Wp + j] -> out[n, c, 2i+kh, 2j+kw]
    y = out_slab.reshape(2, 2, C3, N, Hp, Wp)[:, :, :, :, :Hc, :Wc]
    y = y.transpose(3, 2, 4, 0, 5, 1).reshape(N, C3, Ho, Wo)
    return y


# ------------------------------- pure-JAX reference -------------------------------

def reference_forward(x, params):
    w1, b1, w2, b2, wt, bt = params
    dn = ('NCHW', 'OIHW', 'NCHW')
    hi = lax.Precision.HIGHEST
    y = lax.reduce_window(x, -jnp.inf, lax.max, (1, 1, 2, 2), (1, 1, 2, 2), 'VALID')
    y = lax.conv_general_dilated(y, w1, (1, 1), 'VALID', dimension_numbers=dn,
                                 precision=hi)
    y = jnp.maximum(y + b1[None, :, None, None], 0.0)
    y = lax.conv_general_dilated(y, w2, (1, 1), 'VALID', dimension_numbers=dn,
                                 precision=hi)
    y = jnp.maximum(y + b2[None, :, None, None], 0.0)
    t = jnp.einsum('nihw,iokl->nohwkl', y, wt, precision=hi)
    Nn, Oo, Hh, Ww = t.shape[0], t.shape[1], t.shape[2], t.shape[3]
    y = t.transpose(0, 1, 2, 4, 3, 5).reshape(Nn, Oo, 2 * Hh, 2 * Ww)
    return y + bt[None, :, None, None]


# ------------------------------------ main ------------------------------------

if __name__ == "__main__":
    features = [4, 8, 8]
    key = jax.random.PRNGKey(0)
    ks = jax.random.split(key, 7)
    # deterministic synthetic parameters (PyTorch layouts / shapes)
    w1 = jax.random.normal(ks[0], (features[1], features[0], 3, 3), jnp.float32) * 0.1
    b1 = jax.random.normal(ks[1], (features[1],), jnp.float32) * 0.1
    w2 = jax.random.normal(ks[2], (features[2], features[1], 3, 3), jnp.float32) * 0.1
    b2 = jax.random.normal(ks[3], (features[2],), jnp.float32) * 0.1
    wt = jax.random.normal(ks[4], (features[2], features[2] // 2, 2, 2), jnp.float32) * 0.1
    bt = jax.random.normal(ks[5], (features[2] // 2,), jnp.float32) * 0.1
    params = (w1, b1, w2, b2, wt, bt)

    x = jax.random.normal(ks[6], (2, features[0], 16, 16), jnp.float32)  # NCHW input

    packed = pack_params(params)               # one-time, outside the jitted forward
    fwd = jax.jit(unet_block_forward)

    out = jax.block_until_ready(fwd(x, packed))
    ref = jax.block_until_ready(reference_forward(x, params))

    assert out.shape == (2, features[2] // 2, 8, 8), out.shape
    assert jnp.allclose(out, ref, atol=1e-4, rtol=1e-4), float(jnp.max(jnp.abs(out - ref)))

    # TODO(synk): nn.Dropout (training-mode) and BatchNorm branches are disabled in
    # this config; Dropout would need pltpu.prng_* inside the kernel.
    print("KERNEL_OK")
</pallas_src>

<mosaic_0001>
module attributes {stable_mosaic.version = 11 : i64} {
  func.func @_unet_fused_kernel(%arg0: i32, %arg1: memref<4x4x128xf32, #tpu.memory_space<vmem>>, %arg2: memref<8x36xf32, #tpu.memory_space<vmem>>, %arg3: memref<8x1xf32, #tpu.memory_space<vmem>>, %arg4: memref<8x72xf32, #tpu.memory_space<vmem>>, %arg5: memref<8x1xf32, #tpu.memory_space<vmem>>, %arg6: memref<16x8xf32, #tpu.memory_space<vmem>>, %arg7: memref<16x1xf32, #tpu.memory_space<vmem>>, %arg8: memref<16x128xf32, #tpu.memory_space<vmem>>, %arg9: memref<4x256xf32, #tpu.memory_space<vmem>>, %arg10: memref<8x256xf32, #tpu.memory_space<vmem>>, %arg11: memref<36x128xf32, #tpu.memory_space<vmem>>, %arg12: memref<72x128xf32, #tpu.memory_space<vmem>>) attributes {dimension_semantics = [#tpu.dimension_semantics<arbitrary>], iteration_bounds = array<i64: 1>, scalar_prefetch = 0 : i64, scratch_operands = 4 : i64, tpu.core_type = #tpu.core_type<tc>, window_params = [{pipeline_mode = #tpu.pipeline_mode<synchronous>, transform_indices = @transform_0, window_bounds = array<i64: 4, 4, 128>}, {pipeline_mode = #tpu.pipeline_mode<synchronous>, transform_indices = @transform_1, window_bounds = array<i64: 8, 36>}, {pipeline_mode = #tpu.pipeline_mode<synchronous>, transform_indices = @transform_2, window_bounds = array<i64: 8, 1>}, {pipeline_mode = #tpu.pipeline_mode<synchronous>, transform_indices = @transform_3, window_bounds = array<i64: 8, 72>}, {pipeline_mode = #tpu.pipeline_mode<synchronous>, transform_indices = @transform_4, window_bounds = array<i64: 8, 1>}, {pipeline_mode = #tpu.pipeline_mode<synchronous>, transform_indices = @transform_5, window_bounds = array<i64: 16, 8>}, {pipeline_mode = #tpu.pipeline_mode<synchronous>, transform_indices = @transform_6, window_bounds = array<i64: 16, 1>}, {pipeline_mode = #tpu.pipeline_mode<synchronous>, transform_indices = @transform_7, window_bounds = array<i64: 16, 128>}]} {
    %c0 = arith.constant 0 : index
    %c0_0 = arith.constant 0 : index
    %c0_1 = arith.constant 0 : index
    %0 = vector.load %arg1[%c0, %c0_0, %c0_1] : memref<4x4x128xf32, #tpu.memory_space<vmem>>, vector<1x4x128xf32>
    %1 = vector.shape_cast %0 : vector<1x4x128xf32> to vector<4x128xf32>
    %c1 = arith.constant 1 : index
    %c0_2 = arith.constant 0 : index
    %c0_3 = arith.constant 0 : index
    %2 = vector.load %arg1[%c1, %c0_2, %c0_3] : memref<4x4x128xf32, #tpu.memory_space<vmem>>, vector<1x4x128xf32>
    %3 = vector.shape_cast %2 : vector<1x4x128xf32> to vector<4x128xf32>
    %4 = arith.maximumf %1, %3 : vector<4x128xf32>
    %c2 = arith.constant 2 : index
    %c0_4 = arith.constant 0 : index
    %c0_5 = arith.constant 0 : index
    %5 = vector.load %arg1[%c2, %c0_4, %c0_5] : memref<4x4x128xf32, #tpu.memory_space<vmem>>, vector<1x4x128xf32>
    %6 = vector.shape_cast %5 : vector<1x4x128xf32> to vector<4x128xf32>
    %c3 = arith.constant 3 : index
    %c0_6 = arith.constant 0 : index
    %c0_7 = arith.constant 0 : index
    %7 = vector.load %arg1[%c3, %c0_6, %c0_7] : memref<4x4x128xf32, #tpu.memory_space<vmem>>, vector<1x4x128xf32>
    %8 = vector.shape_cast %7 : vector<1x4x128xf32> to vector<4x128xf32>
    %9 = arith.maximumf %6, %8 : vector<4x128xf32>
    %10 = arith.maximumf %4, %9 : vector<4x128xf32>
    %cst = arith.constant 0.000000e+00 : f32
    %11 = vector.broadcast %cst : f32 to vector<4x128xf32>
    %c0_8 = arith.constant 0 : index
    %c128 = arith.constant 128 : index
    %12 = vector.load %arg9[%c0_8, %c128] : memref<4x256xf32, #tpu.memory_space<vmem>>, vector<4x128xf32>
    tpu.vector_store %arg9[%c0_8, %c128], %11 {strides = array<i32>} : memref<4x256xf32, #tpu.memory_space<vmem>>, vector<4x128xf32>,
    %cst_9 = arith.constant 0.000000e+00 : f32
    %13 = vector.broadcast %cst_9 : f32 to vector<8x128xf32>
    %c0_10 = arith.constant 0 : index
    %c128_11 = arith.constant 128 : index
    %14 = vector.load %arg10[%c0_10, %c128_11] : memref<8x256xf32, #tpu.memory_space<vmem>>, vector<8x128xf32>
    tpu.vector_store %arg10[%c0_10, %c128_11], %13 {strides = array<i32>} : memref<8x256xf32, #tpu.memory_space<vmem>>, vector<8x128xf32>,
    %c0_12 = arith.constant 0 : index
    %c0_13 = arith.constant 0 : index
    %15 = vector.load %arg9[%c0_12, %c0_13] : memref<4x256xf32, #tpu.memory_space<vmem>>, vector<4x128xf32>
    tpu.vector_store %arg9[%c0_12, %c0_13], %10 {strides = array<i32>} : memref<4x256xf32, #tpu.memory_space<vmem>>, vector<4x128xf32>,
    %c0_14 = arith.constant 0 : index
    %c0_15 = arith.constant 0 : index
    %16 = vector.load %arg9[%c0_14, %c0_15] : memref<4x256xf32, #tpu.memory_space<vmem>>, vector<4x128xf32>
    %c0_16 = arith.constant 0 : index
    %c0_17 = arith.constant 0 : index
    %17 = vector.load %arg11[%c0_16, %c0_17] : memref<36x128xf32, #tpu.memory_space<vmem>>, vector<4x128xf32>
    tpu.vector_store %arg11[%c0_16, %c0_17], %16 {strides = array<i32>} : memref<36x128xf32, #tpu.memory_space<vmem>>, vector<4x128xf32>,
    %c0_18 = arith.constant 0 : index
    %c1_19 = arith.constant 1 : index
    %18 = vector.load %arg9[%c0_18, %c1_19] : memref<4x256xf32, #tpu.memory_space<vmem>>, vector<4x128xf32>
    %c4 = arith.constant 4 : index
    %c0_20 = arith.constant 0 : index
    %19 = vector.load %arg11[%c4, %c0_20] : memref<36x128xf32, #tpu.memory_space<vmem>>, vector<4x128xf32>
    tpu.vector_store %arg11[%c4, %c0_20], %18 {strides = array<i32>} : memref<36x128xf32, #tpu.memory_space<vmem>>, vector<4x128xf32>,
    %c0_21 = arith.constant 0 : index
    %c2_22 = arith.constant 2 : index
    %20 = vector.load %arg9[%c0_21, %c2_22] : memref<4x256xf32, #tpu.memory_space<vmem>>, vector<4x128xf32>
    %c8 = arith.constant 8 : index
    %c0_23 = arith.constant 0 : index
    %21 = vector.load %arg11[%c8, %c0_23] : memref<36x128xf32, #tpu.memory_space<vmem>>, vector<4x128xf32>
    tpu.vector_store %arg11[%c8, %c0_23], %20 {strides = array<i32>} : memref<36x128xf32, #tpu.memory_space<vmem>>, vector<4x128xf32>,
    %c0_24 = arith.constant 0 : index
    %c8_25 = arith.constant 8 : index
    %22 = vector.load %arg9[%c0_24, %c8_25] : memref<4x256xf32, #tpu.memory_space<vmem>>, vector<4x128xf32>
    %c12 = arith.constant 12 : index
    %c0_26 = arith.constant 0 : index
    %23 = vector.load %arg11[%c12, %c0_26] : memref<36x128xf32, #tpu.memory_space<vmem>>, vector<4x128xf32>
    tpu.vector_store %arg11[%c12, %c0_26], %22 {strides = array<i32>} : memref<36x128xf32, #tpu.memory_space<vmem>>, vector<4x128xf32>,
    %c0_27 = arith.constant 0 : index
    %c9 = arith.constant 9 : index
    %24 = vector.load %arg9[%c0_27, %c9] : memref<4x256xf32, #tpu.memory_space<vmem>>, vector<4x128xf32>
    %c16 = arith.constant 16 : index
    %c0_28 = arith.constant 0 : index
    %25 = vector.load %arg11[%c16, %c0_28] : memref<36x128xf32, #tpu.memory_space<vmem>>, vector<4x128xf32>
    tpu.vector_store %arg11[%c16, %c0_28], %24 {strides = array<i32>} : memref<36x128xf32, #tpu.memory_space<vmem>>, vector<4x128xf32>,
    %c0_29 = arith.constant 0 : index
    %c10 = arith.constant 10 : index
    %26 = vector.load %arg9[%c0_29, %c10] : memref<4x256xf32, #tpu.memory_space<vmem>>, vector<4x128xf32>
    %c20 = arith.constant 20 : index
    %c0_30 = arith.constant 0 : index
    %27 = vector.load %arg11[%c20, %c0_30] : memref<36x128xf32, #tpu.memory_space<vmem>>, vector<4x128xf32>
    tpu.vector_store %arg11[%c20, %c0_30], %26 {strides = array<i32>} : memref<36x128xf32, #tpu.memory_space<vmem>>, vector<4x128xf32>,
    %c0_31 = arith.constant 0 : index
    %c16_32 = arith.constant 16 : index
    %28 = vector.load %arg9[%c0_31, %c16_32] : memref<4x256xf32, #tpu.memory_space<vmem>>, vector<4x128xf32>
    %c24 = arith.constant 24 : index
    %c0_33 = arith.constant 0 : index
    %29 = vector.load %arg11[%c24, %c0_33] : memref<36x128xf32, #tpu.memory_space<vmem>>, vector<4x128xf32>
    tpu.vector_store %arg11[%c24, %c0_33], %28 {strides = array<i32>} : memref<36x128xf32, #tpu.memory_space<vmem>>, vector<4x128xf32>,
    %c0_34 = arith.constant 0 : index
    %c17 = arith.constant 17 : index
    %30 = vector.load %arg9[%c0_34, %c17] : memref<4x256xf32, #tpu.memory_space<vmem>>, vector<4x128xf32>
    %c28 = arith.constant 28 : index
    %c0_35 = arith.constant 0 : index
    %31 = vector.load %arg11[%c28, %c0_35] : memref<36x128xf32, #tpu.memory_space<vmem>>, vector<4x128xf32>
    tpu.vector_store %arg11[%c28, %c0_35], %30 {strides = array<i32>} : memref<36x128xf32, #tpu.memory_space<vmem>>, vector<4x128xf32>,
    %c0_36 = arith.constant 0 : index
    %c18 = arith.constant 18 : index
    %32 = vector.load %arg9[%c0_36, %c18] : memref<4x256xf32, #tpu.memory_space<vmem>>, vector<4x128xf32>
    %c32 = arith.constant 32 : index
    %c0_37 = arith.constant 0 : index
    %33 = vector.load %arg11[%c32, %c0_37] : memref<36x128xf32, #tpu.memory_space<vmem>>, vector<4x128xf32>
    tpu.vector_store %arg11[%c32, %c0_37], %32 {strides = array<i32>} : memref<36x128xf32, #tpu.memory_space<vmem>>, vector<4x128xf32>,
    %c0_38 = arith.constant 0 : index
    %c0_39 = arith.constant 0 : index
    %34 = vector.load %arg2[%c0_38, %c0_39] : memref<8x36xf32, #tpu.memory_space<vmem>>, vector<8x36xf32>
    %c0_40 = arith.constant 0 : index
    %c0_41 = arith.constant 0 : index
    %35 = vector.load %arg11[%c0_40, %c0_41] : memref<36x128xf32, #tpu.memory_space<vmem>>, vector<36x128xf32>
    %cst_42 = arith.constant dense<0.000000e+00> : vector<8x128xf32>
    %36 = tpu.matmul %34, %35, %cst_42 {dimension_numbers = #tpu.dot_dimension_numbers<[1], [0], [0], [1], [0, 0, 1, 1], [], []>, precision = #tpu.contract_precision<fp32>} : vector<8x36xf32>, vector<36x128xf32>, vector<8x128xf32> -> vector<8x128xf32>
    %c0_43 = arith.constant 0 : index
    %c0_44 = arith.constant 0 : index
    %37 = vector.load %arg3[%c0_43, %c0_44] : memref<8x1xf32, #tpu.memory_space<vmem>>, vector<8x1xf32>
    %38 = vector.broadcast %37 : vector<8x1xf32> to vector<8x128xf32>
    %39 = arith.addf %36, %38 : vector<8x128xf32>
    %cst_45 = arith.constant 0.000000e+00 : f32
    %40 = vector.broadcast %cst_45 : f32 to vector<8x128xf32>
    %41 = arith.maximumf %39, %40 : vector<8x128xf32>
    %c0_46 = arith.constant 0 : index
    %c0_47 = arith.constant 0 : index
    %42 = vector.load %arg10[%c0_46, %c0_47] : memref<8x256xf32, #tpu.memory_space<vmem>>, vector<8x128xf32>
    tpu.vector_store %arg10[%c0_46, %c0_47], %41 {strides = array<i32>} : memref<8x256xf32, #tpu.memory_space<vmem>>, vector<8x128xf32>,
    %c0_48 = arith.constant 0 : index
    %c0_49 = arith.constant 0 : index
    %43 = vector.load %arg10[%c0_48, %c0_49] : memref<8x256xf32, #tpu.memory_space<vmem>>, vector<8x128xf32>
    %c0_50 = arith.constant 0 : index
    %c0_51 = arith.constant 0 : index
    %44 = vector.load %arg12[%c0_50, %c0_51] : memref<72x128xf32, #tpu.memory_space<vmem>>, vector<8x128xf32>
    tpu.vector_store %arg12[%c0_50, %c0_51], %43 {strides = array<i32>} : memref<72x128xf32, #tpu.memory_space<vmem>>, vector<8x128xf32>,
    %c0_52 = arith.constant 0 : index
    %c1_53 = arith.constant 1 : index
    %45 = vector.load %arg10[%c0_52, %c1_53] : memref<8x256xf32, #tpu.memory_space<vmem>>, vector<8x128xf32>
    %c8_54 = arith.constant 8 : index
    %c0_55 = arith.constant 0 : index
    %46 = vector.load %arg12[%c8_54, %c0_55] : memref<72x128xf32, #tpu.memory_space<vmem>>, vector<8x128xf32>
    tpu.vector_store %arg12[%c8_54, %c0_55], %45 {strides = array<i32>} : memref<72x128xf32, #tpu.memory_space<vmem>>, vector<8x128xf32>,
    %c0_56 = arith.constant 0 : index
    %c2_57 = arith.constant 2 : index
    %47 = vector.load %arg10[%c0_56, %c2_57] : memref<8x256xf32, #tpu.memory_space<vmem>>, vector<8x128xf32>
    %c16_58 = arith.constant 16 : index
    %c0_59 = arith.constant 0 : index
    %48 = vector.load %arg12[%c16_58, %c0_59] : memref<72x128xf32, #tpu.memory_space<vmem>>, vector<8x128xf32>
    tpu.vector_store %arg12[%c16_58, %c0_59], %47 {strides = array<i32>} : memref<72x128xf32, #tpu.memory_space<vmem>>, vector<8x128xf32>,
    %c0_60 = arith.constant 0 : index
    %c8_61 = arith.constant 8 : index
    %49 = vector.load %arg10[%c0_60, %c8_61] : memref<8x256xf32, #tpu.memory_space<vmem>>, vector<8x128xf32>
    %c24_62 = arith.constant 24 : index
    %c0_63 = arith.constant 0 : index
    %50 = vector.load %arg12[%c24_62, %c0_63] : memref<72x128xf32, #tpu.memory_space<vmem>>, vector<8x128xf32>
    tpu.vector_store %arg12[%c24_62, %c0_63], %49 {strides = array<i32>} : memref<72x128xf32, #tpu.memory_space<vmem>>, vector<8x128xf32>,
    %c0_64 = arith.constant 0 : index
    %c9_65 = arith.constant 9 : index
    %51 = vector.load %arg10[%c0_64, %c9_65] : memref<8x256xf32, #tpu.memory_space<vmem>>, vector<8x128xf32>
    %c32_66 = arith.constant 32 : index
    %c0_67 = arith.constant 0 : index
    %52 = vector.load %arg12[%c32_66, %c0_67] : memref<72x128xf32, #tpu.memory_space<vmem>>, vector<8x128xf32>
    tpu.vector_store %arg12[%c32_66, %c0_67], %51 {strides = array<i32>} : memref<72x128xf32, #tpu.memory_space<vmem>>, vector<8x128xf32>,
    %c0_68 = arith.constant 0 : index
    %c10_69 = arith.constant 10 : index
    %53 = vector.load %arg10[%c0_68, %c10_69] : memref<8x256xf32, #tpu.memory_space<vmem>>, vector<8x128xf32>
    %c40 = arith.constant 40 : index
    %c0_70 = arith.constant 0 : index
    %54 = vector.load %arg12[%c40, %c0_70] : memref<72x128xf32, #tpu.memory_space<vmem>>, vector<8x128xf32>
    tpu.vector_store %arg12[%c40, %c0_70], %53 {strides = array<i32>} : memref<72x128xf32, #tpu.memory_space<vmem>>, vector<8x128xf32>,
    %c0_71 = arith.constant 0 : index
    %c16_72 = arith.constant 16 : index
    %55 = vector.load %arg10[%c0_71, %c16_72] : memref<8x256xf32, #tpu.memory_space<vmem>>, vector<8x128xf32>
    %c48 = arith.constant 48 : index
    %c0_73 = arith.constant 0 : index
    %56 = vector.load %arg12[%c48, %c0_73] : memref<72x128xf32, #tpu.memory_space<vmem>>, vector<8x128xf32>
    tpu.vector_store %arg12[%c48, %c0_73], %55 {strides = array<i32>} : memref<72x128xf32, #tpu.memory_space<vmem>>, vector<8x128xf32>,
    %c0_74 = arith.constant 0 : index
    %c17_75 = arith.constant 17 : index
    %57 = vector.load %arg10[%c0_74, %c17_75] : memref<8x256xf32, #tpu.memory_space<vmem>>, vector<8x128xf32>
    %c56 = arith.constant 56 : index
    %c0_76 = arith.constant 0 : index
    %58 = vector.load %arg12[%c56, %c0_76] : memref<72x128xf32, #tpu.memory_space<vmem>>, vector<8x128xf32>
    tpu.vector_store %arg12[%c56, %c0_76], %57 {strides = array<i32>} : memref<72x128xf32, #tpu.memory_space<vmem>>, vector<8x128xf32>,
    %c0_77 = arith.constant 0 : index
    %c18_78 = arith.constant 18 : index
    %59 = vector.load %arg10[%c0_77, %c18_78] : memref<8x256xf32, #tpu.memory_space<vmem>>, vector<8x128xf32>
    %c64 = arith.constant 64 : index
    %c0_79 = arith.constant 0 : index
    %60 = vector.load %arg12[%c64, %c0_79] : memref<72x128xf32, #tpu.memory_space<vmem>>, vector<8x128xf32>
    tpu.vector_store %arg12[%c64, %c0_79], %59 {strides = array<i32>} : memref<72x128xf32, #tpu.memory_space<vmem>>, vector<8x128xf32>,
    %c0_80 = arith.constant 0 : index
    %c0_81 = arith.constant 0 : index
    %61 = vector.load %arg4[%c0_80, %c0_81] : memref<8x72xf32, #tpu.memory_space<vmem>>, vector<8x72xf32>
    %c0_82 = arith.constant 0 : index
    %c0_83 = arith.constant 0 : index
    %62 = vector.load %arg12[%c0_82, %c0_83] : memref<72x128xf32, #tpu.memory_space<vmem>>, vector<72x128xf32>
    %cst_84 = arith.constant dense<0.000000e+00> : vector<8x128xf32>
    %63 = tpu.matmul %61, %62, %cst_84 {dimension_numbers = #tpu.dot_dimension_numbers<[1], [0], [0], [1], [0, 0, 1, 1], [], []>, precision = #tpu.contract_precision<fp32>} : vector<8x72xf32>, vector<72x128xf32>, vector<8x128xf32> -> vector<8x128xf32>
    %c0_85 = arith.constant 0 : index
    %c0_86 = arith.constant 0 : index
    %64 = vector.load %arg5[%c0_85, %c0_86] : memref<8x1xf32, #tpu.memory_space<vmem>>, vector<8x1xf32>
    %65 = vector.broadcast %64 : vector<8x1xf32> to vector<8x128xf32>
    %66 = arith.addf %63, %65 : vector<8x128xf32>
    %cst_87 = arith.constant 0.000000e+00 : f32
    %67 = vector.broadcast %cst_87 : f32 to vector<8x128xf32>
    %68 = arith.maximumf %66, %67 : vector<8x128xf32>
    %c0_88 = arith.constant 0 : index
    %c0_89 = arith.constant 0 : index
    %69 = vector.load %arg6[%c0_88, %c0_89] : memref<16x8xf32, #tpu.memory_space<vmem>>, vector<16x8xf32>
    %cst_90 = arith.constant dense<0.000000e+00> : vector<16x128xf32>
    %70 = tpu.matmul %69, %68, %cst_90 {dimension_numbers = #tpu.dot_dimension_numbers<[1], [0], [0], [1], [0, 0, 1, 1], [], []>, precision = #tpu.contract_precision<fp32>} : vector<16x8xf32>, vector<8x128xf32>, vector<16x128xf32> -> vector<16x128xf32>
    %c0_91 = arith.constant 0 : index
    %c0_92 = arith.constant 0 : index
    %71 = vector.load %arg7[%c0_91, %c0_92] : memref<16x1xf32, #tpu.memory_space<vmem>>, vector<16x1xf32>
    %72 = vector.broadcast %71 : vector<16x1xf32> to vector<16x128xf32>
    %73 = arith.addf %70, %72 : vector<16x128xf32>
    %c0_93 = arith.constant 0 : index
    %c0_94 = arith.constant 0 : index
    %74 = vector.load %arg8[%c0_93, %c0_94] : memref<16x128xf32, #tpu.memory_space<vmem>>, vector<16x128xf32>
    tpu.vector_store %arg8[%c0_93, %c0_94], %73 {strides = array<i32>} : memref<16x128xf32, #tpu.memory_space<vmem>>, vector<16x128xf32>,
    return
  }
  func.func @transform_0(%arg0: i32) -> (i32, i32, i32) {
    %c0_i32 = arith.constant 0 : i32
    %c0_i32_0 = arith.constant 0 : i32
    %c0_i32_1 = arith.constant 0 : i32
    %c0_i32_2 = arith.constant 0 : i32
    return %c0_i32, %c0_i32_0, %c0_i32_1 : i32, i32, i32
  }
  func.func @transform_1(%arg0: i32) -> (i32, i32) {
    %c0_i32 = arith.constant 0 : i32
    %c0_i32_0 = arith.constant 0 : i32
    %c0_i32_1 = arith.constant 0 : i32
    return %c0_i32, %c0_i32_0 : i32, i32
  }
  func.func @transform_2(%arg0: i32) -> (i32, i32) {
    %c0_i32 = arith.constant 0 : i32
    %c0_i32_0 = arith.constant 0 : i32
    %c0_i32_1 = arith.constant 0 : i32
    return %c0_i32, %c0_i32_0 : i32, i32
  }
  func.func @transform_3(%arg0: i32) -> (i32, i32) {
    %c0_i32 = arith.constant 0 : i32
    %c0_i32_0 = arith.constant 0 : i32
    %c0_i32_1 = arith.constant 0 : i32
    return %c0_i32, %c0_i32_0 : i32, i32
  }
  func.func @transform_4(%arg0: i32) -> (i32, i32) {
    %c0_i32 = arith.constant 0 : i32
    %c0_i32_0 = arith.constant 0 : i32
    %c0_i32_1 = arith.constant 0 : i32
    return %c0_i32, %c0_i32_0 : i32, i32
  }
  func.func @transform_5(%arg0: i32) -> (i32, i32) {
    %c0_i32 = arith.constant 0 : i32
    %c0_i32_0 = arith.constant 0 : i32
    %c0_i32_1 = arith.constant 0 : i32
    return %c0_i32, %c0_i32_0 : i32, i32
  }
  func.func @transform_6(%arg0: i32) -> (i32, i32) {
    %c0_i32 = arith.constant 0 : i32
    %c0_i32_0 = arith.constant 0 : i32
    %c0_i32_1 = arith.constant 0 : i32
    return %c0_i32, %c0_i32_0 : i32, i32
  }
  func.func @transform_7(%arg0: i32) -> (i32, i32) {
    %c0_i32 = arith.constant 0 : i32
    %c0_i32_0 = arith.constant 0 : i32
    %c0_i32_1 = arith.constant 0 : i32
    return %c0_i32, %c0_i32_0 : i32, i32
  }
}

</mosaic_0001>

<llo_original>
// kernel: unet_block_forward.1
$region0: #{unet_block_forward.1}
  #allocation0 [shape = 'u32[]', space=smem, size = 0x4, offset = 0x4, fixed_abs, tag = 'smem constant byte address 0x4 - core index']
  #allocation1 [shape = 'u32[144,128]{1,0:T(1,128)}', space=vmem, size = 0x12000, scoped, tag = 'internal scratch']
  #allocation2 [shape = 'f32[4,256]{1,0:T(4,128)}', space=vmem, size = 0x1000, scoped, tag = 'scratch operand']
  #allocation3 [shape = 'f32[8,256]{1,0:T(8,128)}', space=vmem, size = 0x2000, scoped, tag = 'scratch operand']
  #allocation4 [shape = 'f32[36,128]{1,0:T(8,128)}', space=vmem, size = 0x5000, scoped, tag = 'scratch operand']
  #allocation5 [shape = 'f32[72,128]{1,0:T(8,128)}', space=vmem, size = 0x9000, scoped, tag = 'scratch operand']
  %s0 = inlined_call_operand.vmem [shape: f32[4,4,128], index: 0, kind: input, shape index: {}]
  %s1 = inlined_call_operand.vmem [shape: f32[8,36], index: 1, kind: input, shape index: {}]
  %s2 = inlined_call_operand.vmem [shape: f32[8,1], index: 2, kind: input, shape index: {}]
  %s3 = inlined_call_operand.vmem [shape: f32[8,72], index: 3, kind: input, shape index: {}]
  %s4 = inlined_call_operand.vmem [shape: f32[8,1], index: 4, kind: input, shape index: {}]
  %s5 = inlined_call_operand.vmem [shape: f32[16,8], index: 5, kind: input, shape index: {}]
  %s6 = inlined_call_operand.vmem [shape: f32[16,1], index: 6, kind: input, shape index: {}]
  %s7 = inlined_call_operand.vmem [shape: f32[16,128], index: 7, kind: output, shape index: {}]
  %s8 = sld [smem:[#allocation0]]
  $region38: #{unet_block_forward.1} parent=0
    _
  %s10 = ssub.s32 1, %s8
  %s11 = scalar_select 0, %s10, %s8
  // Predicated region
  $region2: #{unet_block_forward.1} parent=0 // pred_check
    _
  $region3: #{unet_block_forward.1} parent=0 // pred_check_branch
    %13 = sbr.rel (0) target = $region5
  $region4: #{unet_block_forward.1} parent=0 // pred_region
    _
  $region5: #{unet_block_forward.1} parent=0 // pred_fallthru
    _
  // Predicated region
  $region6: #{unet_block_forward.1} parent=0 // pred_check
    _
  $region7: #{unet_block_forward.1} parent=0 // pred_check_branch
    %15 = sbr.rel (0) target = $region9
  $region8: #{unet_block_forward.1} parent=0 // pred_region
    _
  $region9: #{unet_block_forward.1} parent=0 // pred_fallthru
    _
  // Predicated region
  $region10: #{unet_block_forward.1} parent=0 // pred_check
    _
  $region11: #{unet_block_forward.1} parent=0 // pred_check_branch
    %17 = sbr.rel (0) target = $region13
  $region12: #{unet_block_forward.1} parent=0 // pred_region
    _
  $region13: #{unet_block_forward.1} parent=0 // pred_fallthru
    _
  // Predicated region
  $region14: #{unet_block_forward.1} parent=0 // pred_check
    _
  $region15: #{unet_block_forward.1} parent=0 // pred_check_branch
    %19 = sbr.rel (0) target = $region17
  $region16: #{unet_block_forward.1} parent=0 // pred_region
    _
  $region17: #{unet_block_forward.1} parent=0 // pred_fallthru
    _
  // Predicated region
  $region18: #{unet_block_forward.1} parent=0 // pred_check
    _
  $region19: #{unet_block_forward.1} parent=0 // pred_check_branch
    %21 = sbr.rel (0) target = $region21
  $region20: #{unet_block_forward.1} parent=0 // pred_region
    _
  $region21: #{unet_block_forward.1} parent=0 // pred_fallthru
    _
  // Predicated region
  $region22: #{unet_block_forward.1} parent=0 // pred_check
    _
  $region23: #{unet_block_forward.1} parent=0 // pred_check_branch
    %23 = sbr.rel (0) target = $region25
  $region24: #{unet_block_forward.1} parent=0 // pred_region
    _
  $region25: #{unet_block_forward.1} parent=0 // pred_fallthru
    _
  // Predicated region
  $region26: #{unet_block_forward.1} parent=0 // pred_check
    _
  $region27: #{unet_block_forward.1} parent=0 // pred_check_branch
    %25 = sbr.rel (0) target = $region29
  $region28: #{unet_block_forward.1} parent=0 // pred_region
    _
  $region29: #{unet_block_forward.1} parent=0 // pred_fallthru
    _
  %v26 = vld [vmem:[%s0] sm:$0xf]
  %s27 = scalar_lea.vmem %s0, 4
  %v28 = vld [vmem:[%s27] sm:$0xf]
  %v29 = vmax.f32 %v26, %v28
  %s30 = scalar_lea.vmem %s0, 8
  %v31 = vld [vmem:[%s30] sm:$0xf]
  %s32 = scalar_lea.vmem %s0, 12
  %v33 = vld [vmem:[%s32] sm:$0xf]
  %v34 = vmax.f32 %v31, %v33
  %v35 = vmax.f32 %v29, %v34
  %36 = vst [vmem:[#allocation2 + $0x4] sm:$0xf] 0.0
  %37 = vst [vmem:[#allocation3 + $0x8] sm:$0xff] 0.0
  %38 = vst [vmem:[#allocation2] sm:$0xf] %v35
  %v39 = vld [vmem:[#allocation2] sm:$0xf]
  %40 = vst [vmem:[#allocation4] sm:$0xf] %v39
  %v41 = vld [vmem:[#allocation2] sm:$0xff]
  %v43 = vcombine.high %v41, %v41
  %44 = vrot.lane.b32.xlu0 %v41, 127
  %v45 = vpop.permute.xlu0 %44
  %46 = vrot.lane.b32.xlu0 %v43, 127
  %v47 = vpop.permute.xlu0 %46
  %vm48 = vcmask 1039360
  %v49 = vsel %vm48, %v45, %v47
  %51 = vst [vmem:[#allocation4 + $0x4] sm:$0xf] %v49
  %v52 = vld [vmem:[#allocation2] sm:$0xff]
  %v54 = vcombine.high %v52, %v52
  %55 = vrot.lane.b32.xlu0 %v52, 126
  %v56 = vpop.permute.xlu0 %55
  %57 = vrot.lane.b32.xlu0 %v54, 126
  %v58 = vpop.permute.xlu0 %57
  %vm59 = vcmask 1031168
  %v60 = vsel %vm59, %v56, %v58
  %62 = vst [vmem:[#allocation4 + $0x8] sm:$0xf] %v60
  %v63 = vld [vmem:[#allocation2] sm:$0xff]
  %v65 = vcombine.high %v63, %v63
  %66 = vrot.lane.b32.xlu0 %v63, 120
  %v67 = vpop.permute.xlu0 %66
  %68 = vrot.lane.b32.xlu0 %v65, 120
  %v69 = vpop.permute.xlu0 %68
  %vm70 = vcmask 982016
  %v71 = vsel %vm70, %v67, %v69
  %73 = vst [vmem:[#allocation4 + $0xc] sm:$0xf] %v71
  %v74 = vld [vmem:[#allocation2] sm:$0xff]
  %v76 = vcombine.high %v74, %v74
  %77 = vrot.lane.b32.xlu0 %v74, 119
  %v78 = vpop.permute.xlu0 %77
  %79 = vrot.lane.b32.xlu0 %v76, 119
  %v80 = vpop.permute.xlu0 %79
  %vm81 = vcmask 973824
  %v82 = vsel %vm81, %v78, %v80
  %84 = vst [vmem:[#allocation4 + $0x10] sm:$0xf] %v82
  %v85 = vld [vmem:[#allocation2] sm:$0xff]
  %v87 = vcombine.high %v85, %v85
  %88 = vrot.lane.b32.xlu0 %v85, 118
  %v89 = vpop.permute.xlu0 %88
  %90 = vrot.lane.b32.xlu0 %v87, 118
  %v91 = vpop.permute.xlu0 %90
  %vm92 = vcmask 965632
  %v93 = vsel %vm92, %v89, %v91
  %95 = vst [vmem:[#allocation4 + $0x14] sm:$0xf] %v93
  %v96 = vld [vmem:[#allocation2] sm:$0xff]
  %v98 = vcombine.high %v96, %v96
  %99 = vrot.lane.b32.xlu0 %v96, 112
  %v100 = vpop.permute.xlu0 %99
  %101 = vrot.lane.b32.xlu0 %v98, 112
  %v102 = vpop.permute.xlu0 %101
  %vm103 = vcmask 916480
  %v104 = vsel %vm103, %v100, %v102
  %106 = vst [vmem:[#allocation4 + $0x18] sm:$0xf] %v104
  %v107 = vld [vmem:[#allocation2] sm:$0xff]
  %v109 = vcombine.high %v107, %v107
  %110 = vrot.lane.b32.xlu0 %v107, 111
  %v111 = vpop.permute.xlu0 %110
  %112 = vrot.lane.b32.xlu0 %v109, 111
  %v113 = vpop.permute.xlu0 %112
  %vm114 = vcmask 908288
  %v115 = vsel %vm114, %v111, %v113
  %117 = vst [vmem:[#allocation4 + $0x1c] sm:$0xf] %v115
  %v118 = vld [vmem:[#allocation2] sm:$0xff]
  %v120 = vcombine.high %v118, %v118
  %121 = vrot.lane.b32.xlu0 %v118, 110
  %v122 = vpop.permute.xlu0 %121
  %123 = vrot.lane.b32.xlu0 %v120, 110
  %v124 = vpop.permute.xlu0 %123
  %vm125 = vcmask 900096
  %v126 = vsel %vm125, %v122, %v124
  %128 = vst [vmem:[#allocation4 + $0x20] sm:$0xf] %v126
  %v129 = vld [vmem:[%s1] sm:$0xff]
  %v130 = vld [vmem:[#allocation4] sm:$0xff]
  %v131 = vld [vmem:[#allocation4 + $0x8] sm:$0xff]
  %v132 = vld [vmem:[#allocation4 + $0x10] sm:$0xff]
  %v133 = vld [vmem:[#allocation4 + $0x18] sm:$0xff]
  %v134 = vld [vmem:[#allocation4 + $0x20] sm:$0xf]
  %v135 = vld [vmem:[%s2] sm:$0xff]
  %137 = vset.pattern.permute.xlu0 0
  %138 = vperm.xlu0 %137, %v135
  %v139 = vpop.permute.xlu0 %138
  %vm141 = vcmask 293888
  %v143 = vsel %vm141, %v129, 0
  %vm145 = vcmask 1043456
  %v147 = vsel %vm145, %v134, 0
  %149 = vmatprep.subr.mxu0 0.0
  %150 = vmatpush1.msra.mxu0 0.0
  %151 = vmatprep.subr.mxu0 0.0
  %152 = vmatpush1.msra.mxu0 0.0
  %153 = vmatprep.subr.mxu0 0.0
  %154 = vmatpush1.msra.mxu0 0.0
  %155 = vmatprep.subr.mxu0 0.0
  %156 = vmatpush1.msra.mxu0 0.0
  %157 = vmatprep.subr.mxu0 0.0
  %158 = vmatpush1.msra.mxu0 0.0
  %159 = vmatprep.subr.mxu0 0.0
  %160 = vmatpush1.msra.mxu0 0.0
  %161 = vmatprep.subr.mxu0 0.0
  %162 = vmatpush1.msra.mxu0 0.0
  %163 = vmatprep.subr.mxu0 0.0
  %164 = vmatpush1.msra.mxu0 0.0
  %165 = vmatprep.subr.mxu0 0.0
  %166 = vmatpush1.msra.mxu0 0.0
  %167 = vmatprep.subr.mxu0 0.0
  %168 = vmatpush1.msra.mxu0 0.0
  %169 = vmatprep.subr.mxu0 0.0
  %170 = vmatpush1.msra.mxu0 0.0
  %171 = vmatprep.subr.mxu0 0.0
  %v172 = vand.u32 %v147, 4294901760
  %173 = vmatpush1.msra.mxu0 %v172
  %174 = vmatprep.subr.mxu0 0.0
  %v175 = vand.u32 %v133, 4294901760
  %176 = vmatpush1.msra.mxu0 %v175
  %177 = vmatprep.subr.mxu0 0.0
  %v178 = vand.u32 %v132, 4294901760
  %179 = vmatpush1.msra.mxu0 %v178
  %180 = vmatprep.subr.mxu0 0.0
  %v181 = vand.u32 %v131, 4294901760
  %182 = vmatpush1.msra.mxu0 %v181
  %183 = vmatprep.subr.mxu0 0.0
  %v184 = vand.u32 %v130, 4294901760
  %185 = vmatpush1.msra.mxu0 %v184
  %186 = vmatprep.subr.mxu0 0.0
  %187 = vmatpush2.msra.mxu0 0.0
  %188 = vmatprep.subr.mxu0 0.0
  %189 = vmatpush2.msra.mxu0 0.0
  %190 = vmatprep.subr.mxu0 0.0
  %191 = vmatpush2.msra.mxu0 0.0
  %192 = vmatprep.subr.mxu0 0.0
  %193 = vmatpush2.msra.mxu0 0.0
  %194 = vmatprep.subr.mxu0 0.0
  %195 = vmatpush2.msra.mxu0 0.0
  %196 = vmatprep.subr.mxu0 0.0
  %197 = vmatpush2.msra.mxu0 0.0
  %198 = vmatprep.subr.mxu0 0.0
  %199 = vmatpush2.msra.mxu0 0.0
  %200 = vmatprep.subr.mxu0 0.0
  %201 = vmatpush2.msra.mxu0 0.0
  %202 = vmatprep.subr.mxu0 0.0
  %203 = vmatpush2.msra.mxu0 0.0
  %204 = vmatprep.subr.mxu0 0.0
  %205 = vmatpush2.msra.mxu0 0.0
  %206 = vmatprep.subr.mxu0 0.0
  %207 = vmatpush2.msra.mxu0 0.0
  %208 = vmatprep.subr.mxu0 0.0
  %209 = vmatpush2.msra.mxu0 0.0
  %210 = vmatprep.subr.mxu0 0.0
  %211 = vmatpush2.msra.mxu0 0.0
  %212 = vmatprep.subr.mxu0 0.0
  %213 = vmatpush2.msra.mxu0 0.0
  %214 = vmatprep.subr.mxu0 0.0
  %215 = vmatpush2.msra.mxu0 0.0
  %216 = vmatprep.subr.mxu0 0.0
  %217 = vmatpush2.msra.mxu0 0.0
  %218 = vmatprep.mubr.f32.mxu0 0.0
  %v219 = vand.u32 %v143, 4294901760
  %v220 = vsub.f32 %v143, %v219
  %v221 = vand.u32 %v220, 4294901760
  %v222 = vsub.f32 %v220, %v221
  %v223 = vand.u32 %v222, 4294901760
  %224 = vmatmul.mubr.f32.gmra.mxu0 %v223
  %v225 = vpop.f32.mrf.mxu0
  %v226 = vadd.f32 %v139, %v225
  %v227 = vpop.f32.mrf.mxu0
  %228 = vdwg.mxu0
  %229 = vmatprep.subr.mxu0 0.0
  %230 = vmatpush1.msra.mxu0 0.0
  %231 = vmatprep.subr.mxu0 0.0
  %232 = vmatpush1.msra.mxu0 0.0
  %233 = vmatprep.subr.mxu0 0.0
  %234 = vmatpush1.msra.mxu0 0.0
  %235 = vmatprep.subr.mxu0 0.0
  %236 = vmatpush1.msra.mxu0 0.0
  %237 = vmatprep.subr.mxu0 0.0
  %238 = vmatpush1.msra.mxu0 0.0
  %239 = vmatprep.subr.mxu0 0.0
  %240 = vmatpush1.msra.mxu0 0.0
  %241 = vmatprep.subr.mxu0 0.0
  %242 = vmatpush1.msra.mxu0 0.0
  %243 = vmatprep.subr.mxu0 0.0
  %244 = vmatpush1.msra.mxu0 0.0
  %245 = vmatprep.subr.mxu0 0.0
  %246 = vmatpush1.msra.mxu0 0.0
  %247 = vmatprep.subr.mxu0 0.0
  %248 = vmatpush1.msra.mxu0 0.0
  %249 = vmatprep.subr.mxu0 0.0
  %250 = vmatpush1.msra.mxu0 0.0
  %251 = vmatprep.subr.mxu0 0.0
  %v252 = vand.u32 %v147, 4294901760
  %v253 = vsub.f32 %v147, %v252
  %v254 = vand.u32 %v253, 4294901760
  %v255 = vsub.f32 %v253, %v254
  %v256 = vand.u32 %v255, 4294901760
  %257 = vmatpush1.msra.mxu0 %v256
  %258 = vmatprep.subr.mxu0 0.0
  %v259 = vand.u32 %v133, 4294901760
  %v260 = vsub.f32 %v133, %v259
  %v261 = vand.u32 %v260, 4294901760
  %v262 = vsub.f32 %v260, %v261
  %v263 = vand.u32 %v262, 4294901760
  %264 = vmatpush1.msra.mxu0 %v263
  %265 = vmatprep.subr.mxu0 0.0
  %v266 = vand.u32 %v132, 4294901760
  %v267 = vsub.f32 %v132, %v266
  %v268 = vand.u32 %v267, 4294901760
  %v269 = vsub.f32 %v267, %v268
  %v270 = vand.u32 %v269, 4294901760
  %271 = vmatpush1.msra.mxu0 %v270
  %272 = vmatprep.subr.mxu0 0.0
  %v273 = vand.u32 %v131, 4294901760
  %v274 = vsub.f32 %v131, %v273
  %v275 = vand.u32 %v274, 4294901760
  %v276 = vsub.f32 %v274, %v275
  %v277 = vand.u32 %v276, 4294901760
  %278 = vmatpush1.msra.mxu0 %v277
  %279 = vmatprep.subr.mxu0 0.0
  %v280 = vand.u32 %v130, 4294901760
  %v281 = vsub.f32 %v130, %v280
  %v282 = vand.u32 %v281, 4294901760
  %v283 = vsub.f32 %v281, %v282
  %v284 = vand.u32 %v283, 4294901760
  %285 = vmatpush1.msra.mxu0 %v284
  %286 = vmatprep.subr.mxu0 0.0
  %287 = vmatpush2.msra.mxu0 0.0
  %288 = vmatprep.subr.mxu0 0.0
  %289 = vmatpush2.msra.mxu0 0.0
  %290 = vmatprep.subr.mxu0 0.0
  %291 = vmatpush2.msra.mxu0 0.0
  %292 = vmatprep.subr.mxu0 0.0
  %293 = vmatpush2.msra.mxu0 0.0
  %294 = vmatprep.subr.mxu0 0.0
  %295 = vmatpush2.msra.mxu0 0.0
  %296 = vmatprep.subr.mxu0 0.0
  %297 = vmatpush2.msra.mxu0 0.0
  %298 = vmatprep.subr.mxu0 0.0
  %299 = vmatpush2.msra.mxu0 0.0
  %300 = vmatprep.subr.mxu0 0.0
  %301 = vmatpush2.msra.mxu0 0.0
  %302 = vmatprep.subr.mxu0 0.0
  %303 = vmatpush2.msra.mxu0 0.0
  %304 = vmatprep.subr.mxu0 0.0
  %305 = vmatpush2.msra.mxu0 0.0
  %306 = vmatprep.subr.mxu0 0.0
  %307 = vmatpush2.msra.mxu0 0.0
  %308 = vmatprep.subr.mxu0 0.0
  %309 = vmatpush2.msra.mxu0 0.0
  %310 = vmatprep.subr.mxu0 0.0
  %311 = vmatpush2.msra.mxu0 0.0
  %312 = vmatprep.subr.mxu0 0.0
  %313 = vmatpush2.msra.mxu0 0.0
  %314 = vmatprep.subr.mxu0 0.0
  %315 = vmatpush2.msra.mxu0 0.0
  %316 = vmatprep.subr.mxu0 0.0
  %317 = vmatpush2.msra.mxu0 0.0
  %318 = vmatprep.mubr.f32.mxu0 0.0
  %v319 = vand.u32 %v143, 4294901760
  %320 = vmatmul.mubr.f32.gmra.mxu0 %v319
  %v321 = vpop.f32.mrf.mxu0
  %v322 = vadd.f32 %v226, %v321
  %v323 = vpop.f32.mrf.mxu0
  %324 = vdwg.mxu0
  %325 = vmatprep.subr.mxu0 0.0
  %326 = vmatpush1.msra.mxu0 0.0
  %327 = vmatprep.subr.mxu0 0.0
  %328 = vmatpush1.msra.mxu0 0.0
  %329 = vmatprep.subr.mxu0 0.0
  %330 = vmatpush1.msra.mxu0 0.0
  %331 = vmatprep.subr.mxu0 0.0
  %332 = vmatpush1.msra.mxu0 0.0
  %333 = vmatprep.subr.mxu0 0.0
  %334 = vmatpush1.msra.mxu0 0.0
  %335 = vmatprep.subr.mxu0 0.0
  %336 = vmatpush1.msra.mxu0 0.0
  %337 = vmatprep.subr.mxu0 0.0
  %338 = vmatpush1.msra.mxu0 0.0
  %339 = vmatprep.subr.mxu0 0.0
  %340 = vmatpush1.msra.mxu0 0.0
  %341 = vmatprep.subr.mxu0 0.0
  %342 = vmatpush1.msra.mxu0 0.0
  %343 = vmatprep.subr.mxu0 0.0
  %344 = vmatpush1.msra.mxu0 0.0
  %345 = vmatprep.subr.mxu0 0.0
  %346 = vmatpush1.msra.mxu0 0.0
  %347 = vmatprep.subr.mxu0 0.0
  %v348 = vand.u32 %v147, 4294901760
  %v349 = vsub.f32 %v147, %v348
  %350 = vmatpush1.msra.mxu0 %v349
  %351 = vmatprep.subr.mxu0 0.0
  %v352 = vand.u32 %v133, 4294901760
  %v353 = vsub.f32 %v133, %v352
  %354 = vmatpush1.msra.mxu0 %v353
  %355 = vmatprep.subr.mxu0 0.0
  %v356 = vand.u32 %v132, 4294901760
  %v357 = vsub.f32 %v132, %v356
  %358 = vmatpush1.msra.mxu0 %v357
  %359 = vmatprep.subr.mxu0 0.0
  %v360 = vand.u32 %v131, 4294901760
  %v361 = vsub.f32 %v131, %v360
  %362 = vmatpush1.msra.mxu0 %v361
  %363 = vmatprep.subr.mxu0 0.0
  %v364 = vand.u32 %v130, 4294901760
  %v365 = vsub.f32 %v130, %v364
  %366 = vmatpush1.msra.mxu0 %v365
  %367 = vmatprep.subr.mxu0 0.0
  %368 = vmatpush2.msra.mxu0 0.0
  %369 = vmatprep.subr.mxu0 0.0
  %370 = vmatpush2.msra.mxu0 0.0
  %371 = vmatprep.subr.mxu0 0.0
  %372 = vmatpush2.msra.mxu0 0.0
  %373 = vmatprep.subr.mxu0 0.0
  %374 = vmatpush2.msra.mxu0 0.0
  %375 = vmatprep.subr.mxu0 0.0
  %376 = vmatpush2.msra.mxu0 0.0
  %377 = vmatprep.subr.mxu0 0.0
  %378 = vmatpush2.msra.mxu0 0.0
  %379 = vmatprep.subr.mxu0 0.0
  %380 = vmatpush2.msra.mxu0 0.0
  %381 = vmatprep.subr.mxu0 0.0
  %382 = vmatpush2.msra.mxu0 0.0
  %383 = vmatprep.subr.mxu0 0.0
  %384 = vmatpush2.msra.mxu0 0.0
  %385 = vmatprep.subr.mxu0 0.0
  %386 = vmatpush2.msra.mxu0 0.0
  %387 = vmatprep.subr.mxu0 0.0
  %388 = vmatpush2.msra.mxu0 0.0
  %389 = vmatprep.subr.mxu0 0.0
  %390 = vmatpush2.msra.mxu0 0.0
  %391 = vmatprep.subr.mxu0 0.0
  %392 = vmatpush2.msra.mxu0 0.0
  %393 = vmatprep.subr.mxu0 0.0
  %394 = vmatpush2.msra.mxu0 0.0
  %395 = vmatprep.subr.mxu0 0.0
  %396 = vmatpush2.msra.mxu0 0.0
  %397 = vmatprep.subr.mxu0 0.0
  %398 = vmatpush2.msra.mxu0 0.0
  %399 = vmatprep.mubr.f32.mxu0 0.0
  %v400 = vand.u32 %v143, 4294901760
  %v401 = vsub.f32 %v143, %v400
  %402 = vmatmul.mubr.f32.gmra.mxu0 %v401
  %v403 = vpop.f32.mrf.mxu0
  %v404 = vadd.f32 %v322, %v403
  %v405 = vpop.f32.mrf.mxu0
  %406 = vdwg.mxu0
  %407 = vmatprep.subr.mxu0 0.0
  %408 = vmatpush1.msra.mxu0 0.0
  %409 = vmatprep.subr.mxu0 0.0
  %410 = vmatpush1.msra.mxu0 0.0
  %411 = vmatprep.subr.mxu0 0.0
  %412 = vmatpush1.msra.mxu0 0.0
  %413 = vmatprep.subr.mxu0 0.0
  %414 = vmatpush1.msra.mxu0 0.0
  %415 = vmatprep.subr.mxu0 0.0
  %416 = vmatpush1.msra.mxu0 0.0
  %417 = vmatprep.subr.mxu0 0.0
  %418 = vmatpush1.msra.mxu0 0.0
  %419 = vmatprep.subr.mxu0 0.0
  %420 = vmatpush1.msra.mxu0 0.0
  %421 = vmatprep.subr.mxu0 0.0
  %422 = vmatpush1.msra.mxu0 0.0
  %423 = vmatprep.subr.mxu0 0.0
  %424 = vmatpush1.msra.mxu0 0.0
  %425 = vmatprep.subr.mxu0 0.0
  %426 = vmatpush1.msra.mxu0 0.0
  %427 = vmatprep.subr.mxu0 0.0
  %428 = vmatpush1.msra.mxu0 0.0
  %429 = vmatprep.subr.mxu0 0.0
  %v430 = vand.u32 %v147, 4294901760
  %431 = vmatpush1.msra.mxu0 %v430
  %432 = vmatprep.subr.mxu0 0.0
  %v433 = vand.u32 %v133, 4294901760
  %434 = vmatpush1.msra.mxu0 %v433
  %435 = vmatprep.subr.mxu0 0.0
  %v436 = vand.u32 %v132, 4294901760
  %437 = vmatpush1.msra.mxu0 %v436
  %438 = vmatprep.subr.mxu0 0.0
  %v439 = vand.u32 %v131, 4294901760
  %440 = vmatpush1.msra.mxu0 %v439
  %441 = vmatprep.subr.mxu0 0.0
  %v442 = vand.u32 %v130, 4294901760
  %443 = vmatpush1.msra.mxu0 %v442
  %444 = vmatprep.subr.mxu0 0.0
  %445 = vmatpush2.msra.mxu0 0.0
  %446 = vmatprep.subr.mxu0 0.0
  %447 = vmatpush2.msra.mxu0 0.0
  %448 = vmatprep.subr.mxu0 0.0
  %449 = vmatpush2.msra.mxu0 0.0
  %450 = vmatprep.subr.mxu0 0.0
  %451 = vmatpush2.msra.mxu0 0.0
  %452 = vmatprep.subr.mxu0 0.0
  %453 = vmatpush2.msra.mxu0 0.0
  %454 = vmatprep.subr.mxu0 0.0
  %455 = vmatpush2.msra.mxu0 0.0
  %456 = vmatprep.subr.mxu0 0.0
  %457 = vmatpush2.msra.mxu0 0.0
  %458 = vmatprep.subr.mxu0 0.0
  %459 = vmatpush2.msra.mxu0 0.0
  %460 = vmatprep.subr.mxu0 0.0
  %461 = vmatpush2.msra.mxu0 0.0
  %462 = vmatprep.subr.mxu0 0.0
  %463 = vmatpush2.msra.mxu0 0.0
  %464 = vmatprep.subr.mxu0 0.0
  %465 = vmatpush2.msra.mxu0 0.0
  %466 = vmatprep.subr.mxu0 0.0
  %467 = vmatpush2.msra.mxu0 0.0
  %468 = vmatprep.subr.mxu0 0.0
  %469 = vmatpush2.msra.mxu0 0.0
  %470 = vmatprep.subr.mxu0 0.0
  %471 = vmatpush2.msra.mxu0 0.0
  %472 = vmatprep.subr.mxu0 0.0
  %473 = vmatpush2.msra.mxu0 0.0
  %474 = vmatprep.subr.mxu0 0.0
  %475 = vmatpush2.msra.mxu0 0.0
  %476 = vmatprep.mubr.f32.mxu0 0.0
  %v477 = vand.u32 %v143, 4294901760
  %v478 = vsub.f32 %v143, %v477
  %v479 = vand.u32 %v478, 4294901760
  %480 = vmatmul.mubr.f32.gmra.mxu0 %v479
  %v481 = vpop.f32.mrf.mxu0
  %v482 = vadd.f32 %v404, %v481
  %v483 = vpop.f32.mrf.mxu0
  %484 = vdwg.mxu0
  %485 = vmatprep.subr.mxu0 0.0
  %486 = vmatpush1.msra.mxu0 0.0
  %487 = vmatprep.subr.mxu0 0.0
  %488 = vmatpush1.msra.mxu0 0.0
  %489 = vmatprep.subr.mxu0 0.0
  %490 = vmatpush1.msra.mxu0 0.0
  %491 = vmatprep.subr.mxu0 0.0
  %492 = vmatpush1.msra.mxu0 0.0
  %493 = vmatprep.subr.mxu0 0.0
  %494 = vmatpush1.msra.mxu0 0.0
  %495 = vmatprep.subr.mxu0 0.0
  %496 = vmatpush1.msra.mxu0 0.0
  %497 = vmatprep.subr.mxu0 0.0
  %498 = vmatpush1.msra.mxu0 0.0
  %499 = vmatprep.subr.mxu0 0.0
  %500 = vmatpush1.msra.mxu0 0.0
  %501 = vmatprep.subr.mxu0 0.0
  %502 = vmatpush1.msra.mxu0 0.0
  %503 = vmatprep.subr.mxu0 0.0
  %504 = vmatpush1.msra.mxu0 0.0
  %505 = vmatprep.subr.mxu0 0.0
  %506 = vmatpush1.msra.mxu0 0.0
  %507 = vmatprep.subr.mxu0 0.0
  %v508 = vand.u32 %v147, 4294901760
  %v509 = vsub.f32 %v147, %v508
  %v510 = vand.u32 %v509, 4294901760
  %511 = vmatpush1.msra.mxu0 %v510
  %512 = vmatprep.subr.mxu0 0.0
  %v513 = vand.u32 %v133, 4294901760
  %v514 = vsub.f32 %v133, %v513
  %v515 = vand.u32 %v514, 4294901760
  %516 = vmatpush1.msra.mxu0 %v515
  %517 = vmatprep.subr.mxu0 0.0
  %v518 = vand.u32 %v132, 4294901760
  %v519 = vsub.f32 %v132, %v518
  %v520 = vand.u32 %v519, 4294901760
  %521 = vmatpush1.msra.mxu0 %v520
  %522 = vmatprep.subr.mxu0 0.0
  %v523 = vand.u32 %v131, 4294901760
  %v524 = vsub.f32 %v131, %v523
  %v525 = vand.u32 %v524, 4294901760
  %526 = vmatpush1.msra.mxu0 %v525
  %527 = vmatprep.subr.mxu0 0.0
  %v528 = vand.u32 %v130, 4294901760
  %v529 = vsub.f32 %v130, %v528
  %v530 = vand.u32 %v529, 4294901760
  %531 = vmatpush1.msra.mxu0 %v530
  %532 = vmatprep.subr.mxu0 0.0
  %533 = vmatpush2.msra.mxu0 0.0
  %534 = vmatprep.subr.mxu0 0.0
  %535 = vmatpush2.msra.mxu0 0.0
  %536 = vmatprep.subr.mxu0 0.0
  %537 = vmatpush2.msra.mxu0 0.0
  %538 = vmatprep.subr.mxu0 0.0
  %539 = vmatpush2.msra.mxu0 0.0
  %540 = vmatprep.subr.mxu0 0.0
  %541 = vmatpush2.msra.mxu0 0.0
  %542 = vmatprep.subr.mxu0 0.0
  %543 = vmatpush2.msra.mxu0 0.0
  %544 = vmatprep.subr.mxu0 0.0
  %545 = vmatpush2.msra.mxu0 0.0
  %546 = vmatprep.subr.mxu0 0.0
  %547 = vmatpush2.msra.mxu0 0.0
  %548 = vmatprep.subr.mxu0 0.0
  %549 = vmatpush2.msra.mxu0 0.0
  %550 = vmatprep.subr.mxu0 0.0
  %551 = vmatpush2.msra.mxu0 0.0
  %552 = vmatprep.subr.mxu0 0.0
  %553 = vmatpush2.msra.mxu0 0.0
  %554 = vmatprep.subr.mxu0 0.0
  %555 = vmatpush2.msra.mxu0 0.0
  %556 = vmatprep.subr.mxu0 0.0
  %557 = vmatpush2.msra.mxu0 0.0
  %558 = vmatprep.subr.mxu0 0.0
  %559 = vmatpush2.msra.mxu0 0.0
  %560 = vmatprep.subr.mxu0 0.0
  %561 = vmatpush2.msra.mxu0 0.0
  %562 = vmatprep.subr.mxu0 0.0
  %563 = vmatpush2.msra.mxu0 0.0
  %564 = vmatprep.mubr.f32.mxu0 0.0
  %v565 = vand.u32 %v143, 4294901760
  %566 = vmatmul.mubr.f32.gmra.mxu0 %v565
  %v567 = vpop.f32.mrf.mxu0
  %v568 = vadd.f32 %v482, %v567
  %v569 = vpop.f32.mrf.mxu0
  %570 = vdwg.mxu0
  %571 = vmatprep.subr.mxu0 0.0
  %572 = vmatpush1.msra.mxu0 0.0
  %573 = vmatprep.subr.mxu0 0.0
  %574 = vmatpush1.msra.mxu0 0.0
  %575 = vmatprep.subr.mxu0 0.0
  %576 = vmatpush1.msra.mxu0 0.0
  %577 = vmatprep.subr.mxu0 0.0
  %578 = vmatpush1.msra.mxu0 0.0
  %579 = vmatprep.subr.mxu0 0.0
  %580 = vmatpush1.msra.mxu0 0.0
  %581 = vmatprep.subr.mxu0 0.0
  %582 = vmatpush1.msra.mxu0 0.0
  %583 = vmatprep.subr.mxu0 0.0
  %584 = vmatpush1.msra.mxu0 0.0
  %585 = vmatprep.subr.mxu0 0.0
  %586 = vmatpush1.msra.mxu0 0.0
  %587 = vmatprep.subr.mxu0 0.0
  %588 = vmatpush1.msra.mxu0 0.0
  %589 = vmatprep.subr.mxu0 0.0
  %590 = vmatpush1.msra.mxu0 0.0
  %591 = vmatprep.subr.mxu0 0.0
  %592 = vmatpush1.msra.mxu0 0.0
  %593 = vmatprep.subr.mxu0 0.0
  %v594 = vand.u32 %v147, 4294901760
  %595 = vmatpush1.msra.mxu0 %v594
  %596 = vmatprep.subr.mxu0 0.0
  %v597 = vand.u32 %v133, 4294901760
  %598 = vmatpush1.msra.mxu0 %v597
  %599 = vmatprep.subr.mxu0 0.0
  %v600 = vand.u32 %v132, 4294901760
  %601 = vmatpush1.msra.mxu0 %v600
  %602 = vmatprep.subr.mxu0 0.0
  %v603 = vand.u32 %v131, 4294901760
  %604 = vmatpush1.msra.mxu0 %v603
  %605 = vmatprep.subr.mxu0 0.0
  %v606 = vand.u32 %v130, 4294901760
  %607 = vmatpush1.msra.mxu0 %v606
  %608 = vmatprep.subr.mxu0 0.0
  %609 = vmatpush2.msra.mxu0 0.0
  %610 = vmatprep.subr.mxu0 0.0
  %611 = vmatpush2.msra.mxu0 0.0
  %612 = vmatprep.subr.mxu0 0.0
  %613 = vmatpush2.msra.mxu0 0.0
  %614 = vmatprep.subr.mxu0 0.0
  %615 = vmatpush2.msra.mxu0 0.0
  %616 = vmatprep.subr.mxu0 0.0
  %617 = vmatpush2.msra.mxu0 0.0
  %618 = vmatprep.subr.mxu0 0.0
  %619 = vmatpush2.msra.mxu0 0.0
  %620 = vmatprep.subr.mxu0 0.0
  %621 = vmatpush2.msra.mxu0 0.0
  %622 = vmatprep.subr.mxu0 0.0
  %623 = vmatpush2.msra.mxu0 0.0
  %624 = vmatprep.subr.mxu0 0.0
  %625 = vmatpush2.msra.mxu0 0.0
  %626 = vmatprep.subr.mxu0 0.0
  %627 = vmatpush2.msra.mxu0 0.0
  %628 = vmatprep.subr.mxu0 0.0
  %629 = vmatpush2.msra.mxu0 0.0
  %630 = vmatprep.subr.mxu0 0.0
  %631 = vmatpush2.msra.mxu0 0.0
  %632 = vmatprep.subr.mxu0 0.0
  %633 = vmatpush2.msra.mxu0 0.0
  %634 = vmatprep.subr.mxu0 0.0
  %635 = vmatpush2.msra.mxu0 0.0
  %636 = vmatprep.subr.mxu0 0.0
  %637 = vmatpush2.msra.mxu0 0.0
  %638 = vmatprep.subr.mxu0 0.0
  %639 = vmatpush2.msra.mxu0 0.0
  %640 = vmatprep.mubr.f32.mxu0 0.0
  %v641 = vand.u32 %v143, 4294901760
  %642 = vmatmul.mubr.f32.gmra.mxu0 %v641
  %v643 = vpop.f32.mrf.mxu0
  %v644 = vadd.f32 %v568, %v643
  %v645 = vpop.f32.mrf.mxu0
  %646 = vdwg.mxu0
  %v647 = vmax.f32 %v644, 0.0
  %648 = vst [vmem:[#allocation3] sm:$0xff] %v647
  %v649 = vld [vmem:[#allocation3] sm:$0xff]
  %650 = vst [vmem:[#allocation5] sm:$0xff] %v649
  %v651 = vld [vmem:[#allocation3] sm:$0xff]
  %v652 = vld [vmem:[#allocation3 + $0x8] sm:$0xff]
  %655 = vrot.lane.b32.xlu0 %v651, 127
  %v656 = vpop.permute.xlu0 %655
  %657 = vrot.lane.b32.xlu0 %v652, 127
  %v658 = vpop.permute.xlu0 %657
  %v659 = vsel %vm48, %v656, %v658
  %661 = vst [vmem:[#allocation5 + $0x8] sm:$0xff] %v659
  %v662 = vld [vmem:[#allocation3] sm:$0xff]
  %v663 = vld [vmem:[#allocation3 + $0x8] sm:$0xff]
  %666 = vrot.lane.b32.xlu0 %v662, 126
  %v667 = vpop.permute.xlu0 %666
  %668 = vrot.lane.b32.xlu0 %v663, 126
  %v669 = vpop.permute.xlu0 %668
  %v670 = vsel %vm59, %v667, %v669
  %672 = vst [vmem:[#allocation5 + $0x10] sm:$0xff] %v670
  %v673 = vld [vmem:[#allocation3] sm:$0xff]
  %v674 = vld [vmem:[#allocation3 + $0x8] sm:$0xff]
  %677 = vrot.lane.b32.xlu0 %v673, 120
  %v678 = vpop.permute.xlu0 %677
  %679 = vrot.lane.b32.xlu0 %v674, 120
  %v680 = vpop.permute.xlu0 %679
  %v681 = vsel %vm70, %v678, %v680
  %683 = vst [vmem:[#allocation5 + $0x18] sm:$0xff] %v681
  %v684 = vld [vmem:[#allocation3] sm:$0xff]
  %v685 = vld [vmem:[#allocation3 + $0x8] sm:$0xff]
  %688 = vrot.lane.b32.xlu0 %v684, 119
  %v689 = vpop.permute.xlu0 %688
  %690 = vrot.lane.b32.xlu0 %v685, 119
  %v691 = vpop.permute.xlu0 %690
  %v692 = vsel %vm81, %v689, %v691
  %694 = vst [vmem:[#allocation5 + $0x20] sm:$0xff] %v692
  %v695 = vld [vmem:[#allocation3] sm:$0xff]
  %v696 = vld [vmem:[#allocation3 + $0x8] sm:$0xff]
  %699 = vrot.lane.b32.xlu0 %v695, 118
  %v700 = vpop.permute.xlu0 %699
  %701 = vrot.lane.b32.xlu0 %v696, 118
  %v702 = vpop.permute.xlu0 %701
  %v703 = vsel %vm92, %v700, %v702
  %705 = vst [vmem:[#allocation5 + $0x28] sm:$0xff] %v703
  %v706 = vld [vmem:[#allocation3] sm:$0xff]
  %v707 = vld [vmem:[#allocation3 + $0x8] sm:$0xff]
  %710 = vrot.lane.b32.xlu0 %v706, 112
  %v711 = vpop.permute.xlu0 %710
  %712 = vrot.lane.b32.xlu0 %v707, 112
  %v713 = vpop.permute.xlu0 %712
  %v714 = vsel %vm103, %v711, %v713
  %716 = vst [vmem:[#allocation5 + $0x30] sm:$0xff] %v714
  %v717 = vld [vmem:[#allocation3] sm:$0xff]
  %v718 = vld [vmem:[#allocation3 + $0x8] sm:$0xff]
  %721 = vrot.lane.b32.xlu0 %v717, 111
  %v722 = vpop.permute.xlu0 %721
  %723 = vrot.lane.b32.xlu0 %v718, 111
  %v724 = vpop.permute.xlu0 %723
  %v725 = vsel %vm114, %v722, %v724
  %727 = vst [vmem:[#allocation5 + $0x38] sm:$0xff] %v725
  %v728 = vld [vmem:[#allocation3] sm:$0xff]
  %v729 = vld [vmem:[#allocation3 + $0x8] sm:$0xff]
  %732 = vrot.lane.b32.xlu0 %v728, 110
  %v733 = vpop.permute.xlu0 %732
  %734 = vrot.lane.b32.xlu0 %v729, 110
  %v735 = vpop.permute.xlu0 %734
  %v736 = vsel %vm125, %v733, %v735
  %738 = vst [vmem:[#allocation5 + $0x40] sm:$0xff] %v736
  %v739 = vld [vmem:[%s3] sm:$0xff]
  %v740 = vld [vmem:[#allocation5] sm:$0xff]
  %v741 = vld [vmem:[#allocation5 + $0x8] sm:$0xff]
  %v742 = vld [vmem:[#allocation5 + $0x10] sm:$0xff]
  %v743 = vld [vmem:[#allocation5 + $0x18] sm:$0xff]
  %v744 = vld [vmem:[#allocation5 + $0x20] sm:$0xff]
  %v745 = vld [vmem:[#allocation5 + $0x28] sm:$0xff]
  %v746 = vld [vmem:[#allocation5 + $0x30] sm:$0xff]
  %v747 = vld [vmem:[#allocation5 + $0x38] sm:$0xff]
  %v748 = vld [vmem:[#allocation5 + $0x40] sm:$0xff]
  %v749 = vld [vmem:[%s4] sm:$0xff]
  %751 = vset.pattern.permute.xlu0 0
  %752 = vperm.xlu0 %751, %v749
  %v753 = vpop.permute.xlu0 %752
  %vm755 = vcmask 588800
  %v757 = vsel %vm755, %v739, 0
  %759 = vmatprep.subr.mxu0 0.0
  %760 = vmatpush1.msra.mxu0 0.0
  %761 = vmatprep.subr.mxu0 0.0
  %762 = vmatpush1.msra.mxu0 0.0
  %763 = vmatprep.subr.mxu0 0.0
  %764 = vmatpush1.msra.mxu0 0.0
  %765 = vmatprep.subr.mxu0 0.0
  %766 = vmatpush1.msra.mxu0 0.0
  %767 = vmatprep.subr.mxu0 0.0
  %768 = vmatpush1.msra.mxu0 0.0
  %769 = vmatprep.subr.mxu0 0.0
  %770 = vmatpush1.msra.mxu0 0.0
  %771 = vmatprep.subr.mxu0 0.0
  %772 = vmatpush1.msra.mxu0 0.0
  %773 = vmatprep.subr.mxu0 0.0
  %v774 = vand.u32 %v748, 4294901760
  %775 = vmatpush1.msra.mxu0 %v774
  %776 = vmatprep.subr.mxu0 0.0
  %v777 = vand.u32 %v747, 4294901760
  %778 = vmatpush1.msra.mxu0 %v777
  %779 = vmatprep.subr.mxu0 0.0
  %v780 = vand.u32 %v746, 4294901760
  %781 = vmatpush1.msra.mxu0 %v780
  %782 = vmatprep.subr.mxu0 0.0
  %v783 = vand.u32 %v745, 4294901760
  %784 = vmatpush1.msra.mxu0 %v783
  %785 = vmatprep.subr.mxu0 0.0
  %v786 = vand.u32 %v744, 4294901760
  %787 = vmatpush1.msra.mxu0 %v786
  %788 = vmatprep.subr.mxu0 0.0
  %v789 = vand.u32 %v743, 4294901760
  %790 = vmatpush1.msra.mxu0 %v789
  %791 = vmatprep.subr.mxu0 0.0
  %v792 = vand.u32 %v742, 4294901760
  %793 = vmatpush1.msra.mxu0 %v792
  %794 = vmatprep.subr.mxu0 0.0
  %v795 = vand.u32 %v741, 4294901760
  %796 = vmatpush1.msra.mxu0 %v795
  %797 = vmatprep.subr.mxu0 0.0
  %v798 = vand.u32 %v740, 4294901760
  %799 = vmatpush1.msra.mxu0 %v798
  %800 = vmatprep.subr.mxu0 0.0
  %801 = vmatpush2.msra.mxu0 0.0
  %802 = vmatprep.subr.mxu0 0.0
  %803 = vmatpush2.msra.mxu0 0.0
  %804 = vmatprep.subr.mxu0 0.0
  %805 = vmatpush2.msra.mxu0 0.0
  %806 = vmatprep.subr.mxu0 0.0
  %807 = vmatpush2.msra.mxu0 0.0
  %808 = vmatprep.subr.mxu0 0.0
  %809 = vmatpush2.msra.mxu0 0.0
  %810 = vmatprep.subr.mxu0 0.0
  %811 = vmatpush2.msra.mxu0 0.0
  %812 = vmatprep.subr.mxu0 0.0
  %813 = vmatpush2.msra.mxu0 0.0
  %814 = vmatprep.subr.mxu0 0.0
  %815 = vmatpush2.msra.mxu0 0.0
  %816 = vmatprep.subr.mxu0 0.0
  %817 = vmatpush2.msra.mxu0 0.0
  %818 = vmatprep.subr.mxu0 0.0
  %819 = vmatpush2.msra.mxu0 0.0
  %820 = vmatprep.subr.mxu0 0.0
  %821 = vmatpush2.msra.mxu0 0.0
  %822 = vmatprep.subr.mxu0 0.0
  %823 = vmatpush2.msra.mxu0 0.0
  %824 = vmatprep.subr.mxu0 0.0
  %825 = vmatpush2.msra.mxu0 0.0
  %826 = vmatprep.subr.mxu0 0.0
  %827 = vmatpush2.msra.mxu0 0.0
  %828 = vmatprep.subr.mxu0 0.0
  %829 = vmatpush2.msra.mxu0 0.0
  %830 = vmatprep.subr.mxu0 0.0
  %831 = vmatpush2.msra.mxu0 0.0
  %832 = vmatprep.mubr.f32.mxu0 0.0
  %v833 = vand.u32 %v757, 4294901760
  %v834 = vsub.f32 %v757, %v833
  %v835 = vand.u32 %v834, 4294901760
  %v836 = vsub.f32 %v834, %v835
  %v837 = vand.u32 %v836, 4294901760
  %838 = vmatmul.mubr.f32.gmra.mxu0 %v837
  %v839 = vpop.f32.mrf.mxu0
  %v840 = vadd.f32 %v753, %v839
  %v841 = vpop.f32.mrf.mxu0
  %842 = vdwg.mxu0
  %843 = vmatprep.subr.mxu0 0.0
  %844 = vmatpush1.msra.mxu0 0.0
  %845 = vmatprep.subr.mxu0 0.0
  %846 = vmatpush1.msra.mxu0 0.0
  %847 = vmatprep.subr.mxu0 0.0
  %848 = vmatpush1.msra.mxu0 0.0
  %849 = vmatprep.subr.mxu0 0.0
  %850 = vmatpush1.msra.mxu0 0.0
  %851 = vmatprep.subr.mxu0 0.0
  %852 = vmatpush1.msra.mxu0 0.0
  %853 = vmatprep.subr.mxu0 0.0
  %854 = vmatpush1.msra.mxu0 0.0
  %855 = vmatprep.subr.mxu0 0.0
  %856 = vmatpush1.msra.mxu0 0.0
  %857 = vmatprep.subr.mxu0 0.0
  %v858 = vand.u32 %v748, 4294901760
  %v859 = vsub.f32 %v748, %v858
  %v860 = vand.u32 %v859, 4294901760
  %v861 = vsub.f32 %v859, %v860
  %v862 = vand.u32 %v861, 4294901760
  %863 = vmatpush1.msra.mxu0 %v862
  %864 = vmatprep.subr.mxu0 0.0
  %v865 = vand.u32 %v747, 4294901760
  %v866 = vsub.f32 %v747, %v865
  %v867 = vand.u32 %v866, 4294901760
  %v868 = vsub.f32 %v866, %v867
  %v869 = vand.u32 %v868, 4294901760
  %870 = vmatpush1.msra.mxu0 %v869
  %871 = vmatprep.subr.mxu0 0.0
  %v872 = vand.u32 %v746, 4294901760
  %v873 = vsub.f32 %v746, %v872
  %v874 = vand.u32 %v873, 4294901760
  %v875 = vsub.f32 %v873, %v874
  %v876 = vand.u32 %v875, 4294901760
  %877 = vmatpush1.msra.mxu0 %v876
  %878 = vmatprep.subr.mxu0 0.0
  %v879 = vand.u32 %v745, 4294901760
  %v880 = vsub.f32 %v745, %v879
  %v881 = vand.u32 %v880, 4294901760
  %v882 = vsub.f32 %v880, %v881
  %v883 = vand.u32 %v882, 4294901760
  %884 = vmatpush1.msra.mxu0 %v883
  %885 = vmatprep.subr.mxu0 0.0
  %v886 = vand.u32 %v744, 4294901760
  %v887 = vsub.f32 %v744, %v886
  %v888 = vand.u32 %v887, 4294901760
  %v889 = vsub.f32 %v887, %v888
  %v890 = vand.u32 %v889, 4294901760
  %891 = vmatpush1.msra.mxu0 %v890
  %892 = vmatprep.subr.mxu0 0.0
  %v893 = vand.u32 %v743, 4294901760
  %v894 = vsub.f32 %v743, %v893
  %v895 = vand.u32 %v894, 4294901760
  %v896 = vsub.f32 %v894, %v895
  %v897 = vand.u32 %v896, 4294901760
  %898 = vmatpush1.msra.mxu0 %v897
  %899 = vmatprep.subr.mxu0 0.0
  %v900 = vand.u32 %v742, 4294901760
  %v901 = vsub.f32 %v742, %v900
  %v902 = vand.u32 %v901, 4294901760
  %v903 = vsub.f32 %v901, %v902
  %v904 = vand.u32 %v903, 4294901760
  %905 = vmatpush1.msra.mxu0 %v904
  %906 = vmatprep.subr.mxu0 0.0
  %v907 = vand.u32 %v741, 4294901760
  %v908 = vsub.f32 %v741, %v907
  %v909 = vand.u32 %v908, 4294901760
  %v910 = vsub.f32 %v908, %v909
  %v911 = vand.u32 %v910, 4294901760
  %912 = vmatpush1.msra.mxu0 %v911
  %913 = vmatprep.subr.mxu0 0.0
  %v914 = vand.u32 %v740, 4294901760
  %v915 = vsub.f32 %v740, %v914
  %v916 = vand.u32 %v915, 4294901760
  %v917 = vsub.f32 %v915, %v916
  %v918 = vand.u32 %v917, 4294901760
  %919 = vmatpush1.msra.mxu0 %v918
  %920 = vmatprep.subr.mxu0 0.0
  %921 = vmatpush2.msra.mxu0 0.0
  %922 = vmatprep.subr.mxu0 0.0
  %923 = vmatpush2.msra.mxu0 0.0
  %924 = vmatprep.subr.mxu0 0.0
  %925 = vmatpush2.msra.mxu0 0.0
  %926 = vmatprep.subr.mxu0 0.0
  %927 = vmatpush2.msra.mxu0 0.0
  %928 = vmatprep.subr.mxu0 0.0
  %929 = vmatpush2.msra.mxu0 0.0
  %930 = vmatprep.subr.mxu0 0.0
  %931 = vmatpush2.msra.mxu0 0.0
  %932 = vmatprep.subr.mxu0 0.0
  %933 = vmatpush2.msra.mxu0 0.0
  %934 = vmatprep.subr.mxu0 0.0
  %935 = vmatpush2.msra.mxu0 0.0
  %936 = vmatprep.subr.mxu0 0.0
  %937 = vmatpush2.msra.mxu0 0.0
  %938 = vmatprep.subr.mxu0 0.0
  %939 = vmatpush2.msra.mxu0 0.0
  %940 = vmatprep.subr.mxu0 0.0
  %941 = vmatpush2.msra.mxu0 0.0
  %942 = vmatprep.subr.mxu0 0.0
  %943 = vmatpush2.msra.mxu0 0.0
  %944 = vmatprep.subr.mxu0 0.0
  %945 = vmatpush2.msra.mxu0 0.0
  %946 = vmatprep.subr.mxu0 0.0
  %947 = vmatpush2.msra.mxu0 0.0
  %948 = vmatprep.subr.mxu0 0.0
  %949 = vmatpush2.msra.mxu0 0.0
  %950 = vmatprep.subr.mxu0 0.0
  %951 = vmatpush2.msra.mxu0 0.0
  %952 = vmatprep.mubr.f32.mxu0 0.0
  %v953 = vand.u32 %v757, 4294901760
  %954 = vmatmul.mubr.f32.gmra.mxu0 %v953
  %v955 = vpop.f32.mrf.mxu0
  %v956 = vadd.f32 %v840, %v955
  %v957 = vpop.f32.mrf.mxu0
  %958 = vdwg.mxu0
  %959 = vmatprep.subr.mxu0 0.0
  %960 = vmatpush1.msra.mxu0 0.0
  %961 = vmatprep.subr.mxu0 0.0
  %962 = vmatpush1.msra.mxu0 0.0
  %963 = vmatprep.subr.mxu0 0.0
  %964 = vmatpush1.msra.mxu0 0.0
  %965 = vmatprep.subr.mxu0 0.0
  %966 = vmatpush1.msra.mxu0 0.0
  %967 = vmatprep.subr.mxu0 0.0
  %968 = vmatpush1.msra.mxu0 0.0
  %969 = vmatprep.subr.mxu0 0.0
  %970 = vmatpush1.msra.mxu0 0.0
  %971 = vmatprep.subr.mxu0 0.0
  %972 = vmatpush1.msra.mxu0 0.0
  %973 = vmatprep.subr.mxu0 0.0
  %v974 = vand.u32 %v748, 4294901760
  %v975 = vsub.f32 %v748, %v974
  %976 = vmatpush1.msra.mxu0 %v975
  %977 = vmatprep.subr.mxu0 0.0
  %v978 = vand.u32 %v747, 4294901760
  %v979 = vsub.f32 %v747, %v978
  %980 = vmatpush1.msra.mxu0 %v979
  %981 = vmatprep.subr.mxu0 0.0
  %v982 = vand.u32 %v746, 4294901760
  %v983 = vsub.f32 %v746, %v982
  %984 = vmatpush1.msra.mxu0 %v983
  %985 = vmatprep.subr.mxu0 0.0
  %v986 = vand.u32 %v745, 4294901760
  %v987 = vsub.f32 %v745, %v986
  %988 = vmatpush1.msra.mxu0 %v987
  %989 = vmatprep.subr.mxu0 0.0
  %v990 = vand.u32 %v744, 4294901760
  %v991 = vsub.f32 %v744, %v990
  %992 = vmatpush1.msra.mxu0 %v991
  %993 = vmatprep.subr.mxu0 0.0
  %v994 = vand.u32 %v743, 4294901760
  %v995 = vsub.f32 %v743, %v994
  %996 = vmatpush1.msra.mxu0 %v995
  %997 = vmatprep.subr.mxu0 0.0
  %v998 = vand.u32 %v742, 4294901760
  %v999 = vsub.f32 %v742, %v998
  %1000 = vmatpush1.msra.mxu0 %v999
  %1001 = vmatprep.subr.mxu0 0.0
  %v1002 = vand.u32 %v741, 4294901760
  %v1003 = vsub.f32 %v741, %v1002
  %1004 = vmatpush1.msra.mxu0 %v1003
  %1005 = vmatprep.subr.mxu0 0.0
  %v1006 = vand.u32 %v740, 4294901760
  %v1007 = vsub.f32 %v740, %v1006
  %1008 = vmatpush1.msra.mxu0 %v1007
  %1009 = vmatprep.subr.mxu0 0.0
  %1010 = vmatpush2.msra.mxu0 0.0
  %1011 = vmatprep.subr.mxu0 0.0
  %1012 = vmatpush2.msra.mxu0 0.0
  %1013 = vmatprep.subr.mxu0 0.0
  %1014 = vmatpush2.msra.mxu0 0.0
  %1015 = vmatprep.subr.mxu0 0.0
  %1016 = vmatpush2.msra.mxu0 0.0
  %1017 = vmatprep.subr.mxu0 0.0
  %1018 = vmatpush2.msra.mxu0 0.0
  %1019 = vmatprep.subr.mxu0 0.0
  %1020 = vmatpush2.msra.mxu0 0.0
  %1021 = vmatprep.subr.mxu0 0.0
  %1022 = vmatpush2.msra.mxu0 0.0
  %1023 = vmatprep.subr.mxu0 0.0
  %1024 = vmatpush2.msra.mxu0 0.0
  %1025 = vmatprep.subr.mxu0 0.0
  %1026 = vmatpush2.msra.mxu0 0.0
  %1027 = vmatprep.subr.mxu0 0.0
  %1028 = vmatpush2.msra.mxu0 0.0
  %1029 = vmatprep.subr.mxu0 0.0
  %1030 = vmatpush2.msra.mxu0 0.0
  %1031 = vmatprep.subr.mxu0 0.0
  %1032 = vmatpush2.msra.mxu0 0.0
  %1033 = vmatprep.subr.mxu0 0.0
  %1034 = vmatpush2.msra.mxu0 0.0
  %1035 = vmatprep.subr.mxu0 0.0
  %1036 = vmatpush2.msra.mxu0 0.0
  %1037 = vmatprep.subr.mxu0 0.0
  %1038 = vmatpush2.msra.mxu0 0.0
  %1039 = vmatprep.subr.mxu0 0.0
  %1040 = vmatpush2.msra.mxu0 0.0
  %1041 = vmatprep.mubr.f32.mxu0 0.0
  %v1042 = vand.u32 %v757, 4294901760
  %v1043 = vsub.f32 %v757, %v1042
  %1044 = vmatmul.mubr.f32.gmra.mxu0 %v1043
  %v1045 = vpop.f32.mrf.mxu0
  %v1046 = vadd.f32 %v956, %v1045
  %v1047 = vpop.f32.mrf.mxu0
  %1048 = vdwg.mxu0
  %1049 = vmatprep.subr.mxu0 0.0
  %1050 = vmatpush1.msra.mxu0 0.0
  %1051 = vmatprep.subr.mxu0 0.0
  %1052 = vmatpush1.msra.mxu0 0.0
  %1053 = vmatprep.subr.mxu0 0.0
  %1054 = vmatpush1.msra.mxu0 0.0
  %1055 = vmatprep.subr.mxu0 0.0
  %1056 = vmatpush1.msra.mxu0 0.0
  %1057 = vmatprep.subr.mxu0 0.0
  %1058 = vmatpush1.msra.mxu0 0.0
  %1059 = vmatprep.subr.mxu0 0.0
  %1060 = vmatpush1.msra.mxu0 0.0
  %1061 = vmatprep.subr.mxu0 0.0
  %1062 = vmatpush1.msra.mxu0 0.0
  %1063 = vmatprep.subr.mxu0 0.0
  %v1064 = vand.u32 %v748, 4294901760
  %1065 = vmatpush1.msra.mxu0 %v1064
  %1066 = vmatprep.subr.mxu0 0.0
  %v1067 = vand.u32 %v747, 4294901760
  %1068 = vmatpush1.msra.mxu0 %v1067
  %1069 = vmatprep.subr.mxu0 0.0
  %v1070 = vand.u32 %v746, 4294901760
  %1071 = vmatpush1.msra.mxu0 %v1070
  %1072 = vmatprep.subr.mxu0 0.0
  %v1073 = vand.u32 %v745, 4294901760
  %1074 = vmatpush1.msra.mxu0 %v1073
  %1075 = vmatprep.subr.mxu0 0.0
  %v1076 = vand.u32 %v744, 4294901760
  %1077 = vmatpush1.msra.mxu0 %v1076
  %1078 = vmatprep.subr.mxu0 0.0
  %v1079 = vand.u32 %v743, 4294901760
  %1080 = vmatpush1.msra.mxu0 %v1079
  %1081 = vmatprep.subr.mxu0 0.0
  %v1082 = vand.u32 %v742, 4294901760
  %1083 = vmatpush1.msra.mxu0 %v1082
  %1084 = vmatprep.subr.mxu0 0.0
  %v1085 = vand.u32 %v741, 4294901760
  %1086 = vmatpush1.msra.mxu0 %v1085
  %1087 = vmatprep.subr.mxu0 0.0
  %v1088 = vand.u32 %v740, 4294901760
  %1089 = vmatpush1.msra.mxu0 %v1088
  %1090 = vmatprep.subr.mxu0 0.0
  %1091 = vmatpush2.msra.mxu0 0.0
  %1092 = vmatprep.subr.mxu0 0.0
  %1093 = vmatpush2.msra.mxu0 0.0
  %1094 = vmatprep.subr.mxu0 0.0
  %1095 = vmatpush2.msra.mxu0 0.0
  %1096 = vmatprep.subr.mxu0 0.0
  %1097 = vmatpush2.msra.mxu0 0.0
  %1098 = vmatprep.subr.mxu0 0.0
  %1099 = vmatpush2.msra.mxu0 0.0
  %1100 = vmatprep.subr.mxu0 0.0
  %1101 = vmatpush2.msra.mxu0 0.0
  %1102 = vmatprep.subr.mxu0 0.0
  %1103 = vmatpush2.msra.mxu0 0.0
  %1104 = vmatprep.subr.mxu0 0.0
  %1105 = vmatpush2.msra.mxu0 0.0
  %1106 = vmatprep.subr.mxu0 0.0
  %1107 = vmatpush2.msra.mxu0 0.0
  %1108 = vmatprep.subr.mxu0 0.0
  %1109 = vmatpush2.msra.mxu0 0.0
  %1110 = vmatprep.subr.mxu0 0.0
  %1111 = vmatpush2.msra.mxu0 0.0
  %1112 = vmatprep.subr.mxu0 0.0
  %1113 = vmatpush2.msra.mxu0 0.0
  %1114 = vmatprep.subr.mxu0 0.0
  %1115 = vmatpush2.msra.mxu0 0.0
  %1116 = vmatprep.subr.mxu0 0.0
  %1117 = vmatpush2.msra.mxu0 0.0
  %1118 = vmatprep.subr.mxu0 0.0
  %1119 = vmatpush2.msra.mxu0 0.0
  %1120 = vmatprep.subr.mxu0 0.0
  %1121 = vmatpush2.msra.mxu0 0.0
  %1122 = vmatprep.mubr.f32.mxu0 0.0
  %v1123 = vand.u32 %v757, 4294901760
  %v1124 = vsub.f32 %v757, %v1123
  %v1125 = vand.u32 %v1124, 4294901760
  %1126 = vmatmul.mubr.f32.gmra.mxu0 %v1125
  %v1127 = vpop.f32.mrf.mxu0
  %v1128 = vadd.f32 %v1046, %v1127
  %v1129 = vpop.f32.mrf.mxu0
  %1130 = vdwg.mxu0
  %1131 = vmatprep.subr.mxu0 0.0
  %1132 = vmatpush1.msra.mxu0 0.0
  %1133 = vmatprep.subr.mxu0 0.0
  %1134 = vmatpush1.msra.mxu0 0.0
  %1135 = vmatprep.subr.mxu0 0.0
  %1136 = vmatpush1.msra.mxu0 0.0
  %1137 = vmatprep.subr.mxu0 0.0
  %1138 = vmatpush1.msra.mxu0 0.0
  %1139 = vmatprep.subr.mxu0 0.0
  %1140 = vmatpush1.msra.mxu0 0.0
  %1141 = vmatprep.subr.mxu0 0.0
  %1142 = vmatpush1.msra.mxu0 0.0
  %1143 = vmatprep.subr.mxu0 0.0
  %1144 = vmatpush1.msra.mxu0 0.0
  %1145 = vmatprep.subr.mxu0 0.0
  %v1146 = vand.u32 %v748, 4294901760
  %v1147 = vsub.f32 %v748, %v1146
  %v1148 = vand.u32 %v1147, 4294901760
  %1149 = vmatpush1.msra.mxu0 %v1148
  %1150 = vmatprep.subr.mxu0 0.0
  %v1151 = vand.u32 %v747, 4294901760
  %v1152 = vsub.f32 %v747, %v1151
  %v1153 = vand.u32 %v1152, 4294901760
  %1154 = vmatpush1.msra.mxu0 %v1153
  %1155 = vmatprep.subr.mxu0 0.0
  %v1156 = vand.u32 %v746, 4294901760
  %v1157 = vsub.f32 %v746, %v1156
  %v1158 = vand.u32 %v1157, 4294901760
  %1159 = vmatpush1.msra.mxu0 %v1158
  %1160 = vmatprep.subr.mxu0 0.0
  %v1161 = vand.u32 %v745, 4294901760
  %v1162 = vsub.f32 %v745, %v1161
  %v1163 = vand.u32 %v1162, 4294901760
  %1164 = vmatpush1.msra.mxu0 %v1163
  %1165 = vmatprep.subr.mxu0 0.0
  %v1166 = vand.u32 %v744, 4294901760
  %v1167 = vsub.f32 %v744, %v1166
  %v1168 = vand.u32 %v1167, 4294901760
  %1169 = vmatpush1.msra.mxu0 %v1168
  %1170 = vmatprep.subr.mxu0 0.0
  %v1171 = vand.u32 %v743, 4294901760
  %v1172 = vsub.f32 %v743, %v1171
  %v1173 = vand.u32 %v1172, 4294901760
  %1174 = vmatpush1.msra.mxu0 %v1173
  %1175 = vmatprep.subr.mxu0 0.0
  %v1176 = vand.u32 %v742, 4294901760
  %v1177 = vsub.f32 %v742, %v1176
  %v1178 = vand.u32 %v1177, 4294901760
  %1179 = vmatpush1.msra.mxu0 %v1178
  %1180 = vmatprep.subr.mxu0 0.0
  %v1181 = vand.u32 %v741, 4294901760
  %v1182 = vsub.f32 %v741, %v1181
  %v1183 = vand.u32 %v1182, 4294901760
  %1184 = vmatpush1.msra.mxu0 %v1183
  %1185 = vmatprep.subr.mxu0 0.0
  %v1186 = vand.u32 %v740, 4294901760
  %v1187 = vsub.f32 %v740, %v1186
  %v1188 = vand.u32 %v1187, 4294901760
  %1189 = vmatpush1.msra.mxu0 %v1188
  %1190 = vmatprep.subr.mxu0 0.0
  %1191 = vmatpush2.msra.mxu0 0.0
  %1192 = vmatprep.subr.mxu0 0.0
  %1193 = vmatpush2.msra.mxu0 0.0
  %1194 = vmatprep.subr.mxu0 0.0
  %1195 = vmatpush2.msra.mxu0 0.0
  %1196 = vmatprep.subr.mxu0 0.0
  %1197 = vmatpush2.msra.mxu0 0.0
  %1198 = vmatprep.subr.mxu0 0.0
  %1199 = vmatpush2.msra.mxu0 0.0
  %1200 = vmatprep.subr.mxu0 0.0
  %1201 = vmatpush2.msra.mxu0 0.0
  %1202 = vmatprep.subr.mxu0 0.0
  %1203 = vmatpush2.msra.mxu0 0.0
  %1204 = vmatprep.subr.mxu0 0.0
  %1205 = vmatpush2.msra.mxu0 0.0
  %1206 = vmatprep.subr.mxu0 0.0
  %1207 = vmatpush2.msra.mxu0 0.0
  %1208 = vmatprep.subr.mxu0 0.0
  %1209 = vmatpush2.msra.mxu0 0.0
  %1210 = vmatprep.subr.mxu0 0.0
  %1211 = vmatpush2.msra.mxu0 0.0
  %1212 = vmatprep.subr.mxu0 0.0
  %1213 = vmatpush2.msra.mxu0 0.0
  %1214 = vmatprep.subr.mxu0 0.0
  %1215 = vmatpush2.msra.mxu0 0.0
  %1216 = vmatprep.subr.mxu0 0.0
  %1217 = vmatpush2.msra.mxu0 0.0
  %1218 = vmatprep.subr.mxu0 0.0
  %1219 = vmatpush2.msra.mxu0 0.0
  %1220 = vmatprep.subr.mxu0 0.0
  %1221 = vmatpush2.msra.mxu0 0.0
  %1222 = vmatprep.mubr.f32.mxu0 0.0
  %v1223 = vand.u32 %v757, 4294901760
  %1224 = vmatmul.mubr.f32.gmra.mxu0 %v1223
  %v1225 = vpop.f32.mrf.mxu0
  %v1226 = vadd.f32 %v1128, %v1225
  %v1227 = vpop.f32.mrf.mxu0
  %1228 = vdwg.mxu0
  %1229 = vmatprep.subr.mxu0 0.0
  %1230 = vmatpush1.msra.mxu0 0.0
  %1231 = vmatprep.subr.mxu0 0.0
  %1232 = vmatpush1.msra.mxu0 0.0
  %1233 = vmatprep.subr.mxu0 0.0
  %1234 = vmatpush1.msra.mxu0 0.0
  %1235 = vmatprep.subr.mxu0 0.0
  %1236 = vmatpush1.msra.mxu0 0.0
  %1237 = vmatprep.subr.mxu0 0.0
  %1238 = vmatpush1.msra.mxu0 0.0
  %1239 = vmatprep.subr.mxu0 0.0
  %1240 = vmatpush1.msra.mxu0 0.0
  %1241 = vmatprep.subr.mxu0 0.0
  %1242 = vmatpush1.msra.mxu0 0.0
  %1243 = vmatprep.subr.mxu0 0.0
  %v1244 = vand.u32 %v748, 4294901760
  %1245 = vmatpush1.msra.mxu0 %v1244
  %1246 = vmatprep.subr.mxu0 0.0
  %v1247 = vand.u32 %v747, 4294901760
  %1248 = vmatpush1.msra.mxu0 %v1247
  %1249 = vmatprep.subr.mxu0 0.0
  %v1250 = vand.u32 %v746, 4294901760
  %1251 = vmatpush1.msra.mxu0 %v1250
  %1252 = vmatprep.subr.mxu0 0.0
  %v1253 = vand.u32 %v745, 4294901760
  %1254 = vmatpush1.msra.mxu0 %v1253
  %1255 = vmatprep.subr.mxu0 0.0
  %v1256 = vand.u32 %v744, 4294901760
  %1257 = vmatpush1.msra.mxu0 %v1256
  %1258 = vmatprep.subr.mxu0 0.0
  %v1259 = vand.u32 %v743, 4294901760
  %1260 = vmatpush1.msra.mxu0 %v1259
  %1261 = vmatprep.subr.mxu0 0.0
  %v1262 = vand.u32 %v742, 4294901760
  %1263 = vmatpush1.msra.mxu0 %v1262
  %1264 = vmatprep.subr.mxu0 0.0
  %v1265 = vand.u32 %v741, 4294901760
  %1266 = vmatpush1.msra.mxu0 %v1265
  %1267 = vmatprep.subr.mxu0 0.0
  %v1268 = vand.u32 %v740, 4294901760
  %1269 = vmatpush1.msra.mxu0 %v1268
  %1270 = vmatprep.subr.mxu0 0.0
  %1271 = vmatpush2.msra.mxu0 0.0
  %1272 = vmatprep.subr.mxu0 0.0
  %1273 = vmatpush2.msra.mxu0 0.0
  %1274 = vmatprep.subr.mxu0 0.0
  %1275 = vmatpush2.msra.mxu0 0.0
  %1276 = vmatprep.subr.mxu0 0.0
  %1277 = vmatpush2.msra.mxu0 0.0
  %1278 = vmatprep.subr.mxu0 0.0
  %1279 = vmatpush2.msra.mxu0 0.0
  %1280 = vmatprep.subr.mxu0 0.0
  %1281 = vmatpush2.msra.mxu0 0.0
  %1282 = vmatprep.subr.mxu0 0.0
  %1283 = vmatpush2.msra.mxu0 0.0
  %1284 = vmatprep.subr.mxu0 0.0
  %1285 = vmatpush2.msra.mxu0 0.0
  %1286 = vmatprep.subr.mxu0 0.0
  %1287 = vmatpush2.msra.mxu0 0.0
  %1288 = vmatprep.subr.mxu0 0.0
  %1289 = vmatpush2.msra.mxu0 0.0
  %1290 = vmatprep.subr.mxu0 0.0
  %1291 = vmatpush2.msra.mxu0 0.0
  %1292 = vmatprep.subr.mxu0 0.0
  %1293 = vmatpush2.msra.mxu0 0.0
  %1294 = vmatprep.subr.mxu0 0.0
  %1295 = vmatpush2.msra.mxu0 0.0
  %1296 = vmatprep.subr.mxu0 0.0
  %1297 = vmatpush2.msra.mxu0 0.0
  %1298 = vmatprep.subr.mxu0 0.0
  %1299 = vmatpush2.msra.mxu0 0.0
  %1300 = vmatprep.subr.mxu0 0.0
  %1301 = vmatpush2.msra.mxu0 0.0
  %1302 = vmatprep.mubr.f32.mxu0 0.0
  %v1303 = vand.u32 %v757, 4294901760
  %1304 = vmatmul.mubr.f32.gmra.mxu0 %v1303
  %v1305 = vpop.f32.mrf.mxu0
  %v1306 = vadd.f32 %v1226, %v1305
  %v1307 = vpop.f32.mrf.mxu0
  %1308 = vdwg.mxu0
  %v1309 = vmax.f32 %v1306, 0.0
  %v1310 = vld [vmem:[%s5] sm:$0xff]
  %v1311 = vld [vmem:[%s5 + $0x8] sm:$0xff]
  %v1312 = vld [vmem:[%s6] sm:$0xff]
  %v1313 = vld [vmem:[%s6 + $0x8] sm:$0xff]
  %1315 = vset.pattern.permute.xlu0 0
  %1316 = vperm.xlu0 %1315, %v1312
  %v1317 = vpop.permute.xlu0 %1316
  %1320 = vset.pattern.permute.xlu0 0
  %1321 = vperm.xlu0 %1320, %v1313
  %v1322 = vpop.permute.xlu0 %1321
  %vm1324 = vcmask 64512
  %v1326 = vsel %vm1324, %v1310, 0
  %v1329 = vsel %vm1324, %v1311, 0
  %1331 = vmatprep.subr.mxu0 0.0
  %1332 = vmatpush1.msra.mxu0 0.0
  %1333 = vmatprep.subr.mxu0 0.0
  %1334 = vmatpush1.msra.mxu0 0.0
  %1335 = vmatprep.subr.mxu0 0.0
  %1336 = vmatpush1.msra.mxu0 0.0
  %1337 = vmatprep.subr.mxu0 0.0
  %1338 = vmatpush1.msra.mxu0 0.0
  %1339 = vmatprep.subr.mxu0 0.0
  %1340 = vmatpush1.msra.mxu0 0.0
  %1341 = vmatprep.subr.mxu0 0.0
  %1342 = vmatpush1.msra.mxu0 0.0
  %1343 = vmatprep.subr.mxu0 0.0
  %1344 = vmatpush1.msra.mxu0 0.0
  %1345 = vmatprep.subr.mxu0 0.0
  %1346 = vmatpush1.msra.mxu0 0.0
  %1347 = vmatprep.subr.mxu0 0.0
  %1348 = vmatpush1.msra.mxu0 0.0
  %1349 = vmatprep.subr.mxu0 0.0
  %1350 = vmatpush1.msra.mxu0 0.0
  %1351 = vmatprep.subr.mxu0 0.0
  %1352 = vmatpush1.msra.mxu0 0.0
  %1353 = vmatprep.subr.mxu0 0.0
  %1354 = vmatpush1.msra.mxu0 0.0
  %1355 = vmatprep.subr.mxu0 0.0
  %1356 = vmatpush1.msra.mxu0 0.0
  %1357 = vmatprep.subr.mxu0 0.0
  %1358 = vmatpush1.msra.mxu0 0.0
  %1359 = vmatprep.subr.mxu0 0.0
  %1360 = vmatpush1.msra.mxu0 0.0
  %1361 = vmatprep.subr.mxu0 0.0
  %v1362 = vand.u32 %v1309, 4294901760
  %1363 = vmatpush1.msra.mxu0 %v1362
  %1364 = vmatprep.subr.mxu0 0.0
  %1365 = vmatpush2.msra.mxu0 0.0
  %1366 = vmatprep.subr.mxu0 0.0
  %1367 = vmatpush2.msra.mxu0 0.0
  %1368 = vmatprep.subr.mxu0 0.0
  %1369 = vmatpush2.msra.mxu0 0.0
  %1370 = vmatprep.subr.mxu0 0.0
  %1371 = vmatpush2.msra.mxu0 0.0
  %1372 = vmatprep.subr.mxu0 0.0
  %1373 = vmatpush2.msra.mxu0 0.0
  %1374 = vmatprep.subr.mxu0 0.0
  %1375 = vmatpush2.msra.mxu0 0.0
  %1376 = vmatprep.subr.mxu0 0.0
  %1377 = vmatpush2.msra.mxu0 0.0
  %1378 = vmatprep.subr.mxu0 0.0
  %1379 = vmatpush2.msra.mxu0 0.0
  %1380 = vmatprep.subr.mxu0 0.0
  %1381 = vmatpush2.msra.mxu0 0.0
  %1382 = vmatprep.subr.mxu0 0.0
  %1383 = vmatpush2.msra.mxu0 0.0
  %1384 = vmatprep.subr.mxu0 0.0
  %1385 = vmatpush2.msra.mxu0 0.0
  %1386 = vmatprep.subr.mxu0 0.0
  %1387 = vmatpush2.msra.mxu0 0.0
  %1388 = vmatprep.subr.mxu0 0.0
  %1389 = vmatpush2.msra.mxu0 0.0
  %1390 = vmatprep.subr.mxu0 0.0
  %1391 = vmatpush2.msra.mxu0 0.0
  %1392 = vmatprep.subr.mxu0 0.0
  %1393 = vmatpush2.msra.mxu0 0.0
  %1394 = vmatprep.subr.mxu0 0.0
  %1395 = vmatpush2.msra.mxu0 0.0
  %1396 = vmatprep.mubr.f32.mxu0 0.0
  %v1397 = vand.u32 %v1326, 4294901760
  %v1398 = vsub.f32 %v1326, %v1397
  %v1399 = vand.u32 %v1398, 4294901760
  %v1400 = vsub.f32 %v1398, %v1399
  %v1401 = vand.u32 %v1400, 4294901760
  %1402 = vmatmul.mubr.f32.gmra.mxu0 %v1401
  %v1403 = vpop.f32.mrf.mxu0
  %v1404 = vadd.f32 %v1317, %v1403
  %v1405 = vpop.f32.mrf.mxu0
  %1406 = vmatprep.mubr.f32.mxu0 0.0
  %v1407 = vand.u32 %v1329, 4294901760
  %v1408 = vsub.f32 %v1329, %v1407
  %v1409 = vand.u32 %v1408, 4294901760
  %v1410 = vsub.f32 %v1408, %v1409
  %v1411 = vand.u32 %v1410, 4294901760
  %1412 = vmatmul.mubr.f32.gmra.mxu0 %v1411
  %v1413 = vpop.f32.mrf.mxu0
  %v1414 = vadd.f32 %v1322, %v1413
  %v1415 = vpop.f32.mrf.mxu0
  %1416 = vdwg.mxu0
  %1417 = vmatprep.subr.mxu0 0.0
  %1418 = vmatpush1.msra.mxu0 0.0
  %1419 = vmatprep.subr.mxu0 0.0
  %1420 = vmatpush1.msra.mxu0 0.0
  %1421 = vmatprep.subr.mxu0 0.0
  %1422 = vmatpush1.msra.mxu0 0.0
  %1423 = vmatprep.subr.mxu0 0.0
  %1424 = vmatpush1.msra.mxu0 0.0
  %1425 = vmatprep.subr.mxu0 0.0
  %1426 = vmatpush1.msra.mxu0 0.0
  %1427 = vmatprep.subr.mxu0 0.0
  %1428 = vmatpush1.msra.mxu0 0.0
  %1429 = vmatprep.subr.mxu0 0.0
  %1430 = vmatpush1.msra.mxu0 0.0
  %1431 = vmatprep.subr.mxu0 0.0
  %1432 = vmatpush1.msra.mxu0 0.0
  %1433 = vmatprep.subr.mxu0 0.0
  %1434 = vmatpush1.msra.mxu0 0.0
  %1435 = vmatprep.subr.mxu0 0.0
  %1436 = vmatpush1.msra.mxu0 0.0
  %1437 = vmatprep.subr.mxu0 0.0
  %1438 = vmatpush1.msra.mxu0 0.0
  %1439 = vmatprep.subr.mxu0 0.0
  %1440 = vmatpush1.msra.mxu0 0.0
  %1441 = vmatprep.subr.mxu0 0.0
  %1442 = vmatpush1.msra.mxu0 0.0
  %1443 = vmatprep.subr.mxu0 0.0
  %1444 = vmatpush1.msra.mxu0 0.0
  %1445 = vmatprep.subr.mxu0 0.0
  %1446 = vmatpush1.msra.mxu0 0.0
  %1447 = vmatprep.subr.mxu0 0.0
  %v1448 = vand.u32 %v1309, 4294901760
  %v1449 = vsub.f32 %v1309, %v1448
  %v1450 = vand.u32 %v1449, 4294901760
  %v1451 = vsub.f32 %v1449, %v1450
  %v1452 = vand.u32 %v1451, 4294901760
  %1453 = vmatpush1.msra.mxu0 %v1452
  %1454 = vmatprep.subr.mxu0 0.0
  %1455 = vmatpush2.msra.mxu0 0.0
  %1456 = vmatprep.subr.mxu0 0.0
  %1457 = vmatpush2.msra.mxu0 0.0
  %1458 = vmatprep.subr.mxu0 0.0
  %1459 = vmatpush2.msra.mxu0 0.0
  %1460 = vmatprep.subr.mxu0 0.0
  %1461 = vmatpush2.msra.mxu0 0.0
  %1462 = vmatprep.subr.mxu0 0.0
  %1463 = vmatpush2.msra.mxu0 0.0
  %1464 = vmatprep.subr.mxu0 0.0
  %1465 = vmatpush2.msra.mxu0 0.0
  %1466 = vmatprep.subr.mxu0 0.0
  %1467 = vmatpush2.msra.mxu0 0.0
  %1468 = vmatprep.subr.mxu0 0.0
  %1469 = vmatpush2.msra.mxu0 0.0
  %1470 = vmatprep.subr.mxu0 0.0
  %1471 = vmatpush2.msra.mxu0 0.0
  %1472 = vmatprep.subr.mxu0 0.0
  %1473 = vmatpush2.msra.mxu0 0.0
  %1474 = vmatprep.subr.mxu0 0.0
  %1475 = vmatpush2.msra.mxu0 0.0
  %1476 = vmatprep.subr.mxu0 0.0
  %1477 = vmatpush2.msra.mxu0 0.0
  %1478 = vmatprep.subr.mxu0 0.0
  %1479 = vmatpush2.msra.mxu0 0.0
  %1480 = vmatprep.subr.mxu0 0.0
  %1481 = vmatpush2.msra.mxu0 0.0
  %1482 = vmatprep.subr.mxu0 0.0
  %1483 = vmatpush2.msra.mxu0 0.0
  %1484 = vmatprep.subr.mxu0 0.0
  %1485 = vmatpush2.msra.mxu0 0.0
  %1486 = vmatprep.mubr.f32.mxu0 0.0
  %v1487 = vand.u32 %v1326, 4294901760
  %1488 = vmatmul.mubr.f32.gmra.mxu0 %v1487
  %v1489 = vpop.f32.mrf.mxu0
  %v1490 = vadd.f32 %v1404, %v1489
  %v1491 = vpop.f32.mrf.mxu0
  %1492 = vmatprep.mubr.f32.mxu0 0.0
  %v1493 = vand.u32 %v1329, 4294901760
  %1494 = vmatmul.mubr.f32.gmra.mxu0 %v1493
  %v1495 = vpop.f32.mrf.mxu0
  %v1496 = vadd.f32 %v1414, %v1495
  %v1497 = vpop.f32.mrf.mxu0
  %1498 = vdwg.mxu0
  %1499 = vmatprep.subr.mxu0 0.0
  %1500 = vmatpush1.msra.mxu0 0.0
  %1501 = vmatprep.subr.mxu0 0.0
  %1502 = vmatpush1.msra.mxu0 0.0
  %1503 = vmatprep.subr.mxu0 0.0
  %1504 = vmatpush1.msra.mxu0 0.0
  %1505 = vmatprep.subr.mxu0 0.0
  %1506 = vmatpush1.msra.mxu0 0.0
  %1507 = vmatprep.subr.mxu0 0.0
  %1508 = vmatpush1.msra.mxu0 0.0
  %1509 = vmatprep.subr.mxu0 0.0
  %1510 = vmatpush1.msra.mxu0 0.0
  %1511 = vmatprep.subr.mxu0 0.0
  %1512 = vmatpush1.msra.mxu0 0.0
  %1513 = vmatprep.subr.mxu0 0.0
  %1514 = vmatpush1.msra.mxu0 0.0
  %1515 = vmatprep.subr.mxu0 0.0
  %1516 = vmatpush1.msra.mxu0 0.0
  %1517 = vmatprep.subr.mxu0 0.0
  %1518 = vmatpush1.msra.mxu0 0.0
  %1519 = vmatprep.subr.mxu0 0.0
  %1520 = vmatpush1.msra.mxu0 0.0
  %1521 = vmatprep.subr.mxu0 0.0
  %1522 = vmatpush1.msra.mxu0 0.0
  %1523 = vmatprep.subr.mxu0 0.0
  %1524 = vmatpush1.msra.mxu0 0.0
  %1525 = vmatprep.subr.mxu0 0.0
  %1526 = vmatpush1.msra.mxu0 0.0
  %1527 = vmatprep.subr.mxu0 0.0
  %1528 = vmatpush1.msra.mxu0 0.0
  %1529 = vmatprep.subr.mxu0 0.0
  %v1530 = vand.u32 %v1309, 4294901760
  %v1531 = vsub.f32 %v1309, %v1530
  %1532 = vmatpush1.msra.mxu0 %v1531
  %1533 = vmatprep.subr.mxu0 0.0
  %1534 = vmatpush2.msra.mxu0 0.0
  %1535 = vmatprep.subr.mxu0 0.0
  %1536 = vmatpush2.msra.mxu0 0.0
  %1537 = vmatprep.subr.mxu0 0.0
  %1538 = vmatpush2.msra.mxu0 0.0
  %1539 = vmatprep.subr.mxu0 0.0
  %1540 = vmatpush2.msra.mxu0 0.0
  %1541 = vmatprep.subr.mxu0 0.0
  %1542 = vmatpush2.msra.mxu0 0.0
  %1543 = vmatprep.subr.mxu0 0.0
  %1544 = vmatpush2.msra.mxu0 0.0
  %1545 = vmatprep.subr.mxu0 0.0
  %1546 = vmatpush2.msra.mxu0 0.0
  %1547 = vmatprep.subr.mxu0 0.0
  %1548 = vmatpush2.msra.mxu0 0.0
  %1549 = vmatprep.subr.mxu0 0.0
  %1550 = vmatpush2.msra.mxu0 0.0
  %1551 = vmatprep.subr.mxu0 0.0
  %1552 = vmatpush2.msra.mxu0 0.0
  %1553 = vmatprep.subr.mxu0 0.0
  %1554 = vmatpush2.msra.mxu0 0.0
  %1555 = vmatprep.subr.mxu0 0.0
  %1556 = vmatpush2.msra.mxu0 0.0
  %1557 = vmatprep.subr.mxu0 0.0
  %1558 = vmatpush2.msra.mxu0 0.0
  %1559 = vmatprep.subr.mxu0 0.0
  %1560 = vmatpush2.msra.mxu0 0.0
  %1561 = vmatprep.subr.mxu0 0.0
  %1562 = vmatpush2.msra.mxu0 0.0
  %1563 = vmatprep.subr.mxu0 0.0
  %1564 = vmatpush2.msra.mxu0 0.0
  %1565 = vmatprep.mubr.f32.mxu0 0.0
  %v1566 = vand.u32 %v1326, 4294901760
  %v1567 = vsub.f32 %v1326, %v1566
  %1568 = vmatmul.mubr.f32.gmra.mxu0 %v1567
  %v1569 = vpop.f32.mrf.mxu0
  %v1570 = vadd.f32 %v1490, %v1569
  %v1571 = vpop.f32.mrf.mxu0
  %1572 = vmatprep.mubr.f32.mxu0 0.0
  %v1573 = vand.u32 %v1329, 4294901760
  %v1574 = vsub.f32 %v1329, %v1573
  %1575 = vmatmul.mubr.f32.gmra.mxu0 %v1574
  %v1576 = vpop.f32.mrf.mxu0
  %v1577 = vadd.f32 %v1496, %v1576
  %v1578 = vpop.f32.mrf.mxu0
  %1579 = vdwg.mxu0
  %1580 = vmatprep.subr.mxu0 0.0
  %1581 = vmatpush1.msra.mxu0 0.0
  %1582 = vmatprep.subr.mxu0 0.0
  %1583 = vmatpush1.msra.mxu0 0.0
  %1584 = vmatprep.subr.mxu0 0.0
  %1585 = vmatpush1.msra.mxu0 0.0
  %1586 = vmatprep.subr.mxu0 0.0
  %1587 = vmatpush1.msra.mxu0 0.0
  %1588 = vmatprep.subr.mxu0 0.0
  %1589 = vmatpush1.msra.mxu0 0.0
  %1590 = vmatprep.subr.mxu0 0.0
  %1591 = vmatpush1.msra.mxu0 0.0
  %1592 = vmatprep.subr.mxu0 0.0
  %1593 = vmatpush1.msra.mxu0 0.0
  %1594 = vmatprep.subr.mxu0 0.0
  %1595 = vmatpush1.msra.mxu0 0.0
  %1596 = vmatprep.subr.mxu0 0.0
  %1597 = vmatpush1.msra.mxu0 0.0
  %1598 = vmatprep.subr.mxu0 0.0
  %1599 = vmatpush1.msra.mxu0 0.0
  %1600 = vmatprep.subr.mxu0 0.0
  %1601 = vmatpush1.msra.mxu0 0.0
  %1602 = vmatprep.subr.mxu0 0.0
  %1603 = vmatpush1.msra.mxu0 0.0
  %1604 = vmatprep.subr.mxu0 0.0
  %1605 = vmatpush1.msra.mxu0 0.0
  %1606 = vmatprep.subr.mxu0 0.0
  %1607 = vmatpush1.msra.mxu0 0.0
  %1608 = vmatprep.subr.mxu0 0.0
  %1609 = vmatpush1.msra.mxu0 0.0
  %1610 = vmatprep.subr.mxu0 0.0
  %v1611 = vand.u32 %v1309, 4294901760
  %1612 = vmatpush1.msra.mxu0 %v1611
  %1613 = vmatprep.subr.mxu0 0.0
  %1614 = vmatpush2.msra.mxu0 0.0
  %1615 = vmatprep.subr.mxu0 0.0
  %1616 = vmatpush2.msra.mxu0 0.0
  %1617 = vmatprep.subr.mxu0 0.0
  %1618 = vmatpush2.msra.mxu0 0.0
  %1619 = vmatprep.subr.mxu0 0.0
  %1620 = vmatpush2.msra.mxu0 0.0
  %1621 = vmatprep.subr.mxu0 0.0
  %1622 = vmatpush2.msra.mxu0 0.0
  %1623 = vmatprep.subr.mxu0 0.0
  %1624 = vmatpush2.msra.mxu0 0.0
  %1625 = vmatprep.subr.mxu0 0.0
  %1626 = vmatpush2.msra.mxu0 0.0
  %1627 = vmatprep.subr.mxu0 0.0
  %1628 = vmatpush2.msra.mxu0 0.0
  %1629 = vmatprep.subr.mxu0 0.0
  %1630 = vmatpush2.msra.mxu0 0.0
  %1631 = vmatprep.subr.mxu0 0.0
  %1632 = vmatpush2.msra.mxu0 0.0
  %1633 = vmatprep.subr.mxu0 0.0
  %1634 = vmatpush2.msra.mxu0 0.0
  %1635 = vmatprep.subr.mxu0 0.0
  %1636 = vmatpush2.msra.mxu0 0.0
  %1637 = vmatprep.subr.mxu0 0.0
  %1638 = vmatpush2.msra.mxu0 0.0
  %1639 = vmatprep.subr.mxu0 0.0
  %1640 = vmatpush2.msra.mxu0 0.0
  %1641 = vmatprep.subr.mxu0 0.0
  %1642 = vmatpush2.msra.mxu0 0.0
  %1643 = vmatprep.subr.mxu0 0.0
  %1644 = vmatpush2.msra.mxu0 0.0
  %1645 = vmatprep.mubr.f32.mxu0 0.0
  %v1646 = vand.u32 %v1326, 4294901760
  %v1647 = vsub.f32 %v1326, %v1646
  %v1648 = vand.u32 %v1647, 4294901760
  %1649 = vmatmul.mubr.f32.gmra.mxu0 %v1648
  %v1650 = vpop.f32.mrf.mxu0
  %v1651 = vadd.f32 %v1570, %v1650
  %v1652 = vpop.f32.mrf.mxu0
  %1653 = vmatprep.mubr.f32.mxu0 0.0
  %v1654 = vand.u32 %v1329, 4294901760
  %v1655 = vsub.f32 %v1329, %v1654
  %v1656 = vand.u32 %v1655, 4294901760
  %1657 = vmatmul.mubr.f32.gmra.mxu0 %v1656
  %v1658 = vpop.f32.mrf.mxu0
  %v1659 = vadd.f32 %v1577, %v1658
  %v1660 = vpop.f32.mrf.mxu0
  %1661 = vdwg.mxu0
  %1662 = vmatprep.subr.mxu0 0.0
  %1663 = vmatpush1.msra.mxu0 0.0
  %1664 = vmatprep.subr.mxu0 0.0
  %1665 = vmatpush1.msra.mxu0 0.0
  %1666 = vmatprep.subr.mxu0 0.0
  %1667 = vmatpush1.msra.mxu0 0.0
  %1668 = vmatprep.subr.mxu0 0.0
  %1669 = vmatpush1.msra.mxu0 0.0
  %1670 = vmatprep.subr.mxu0 0.0
  %1671 = vmatpush1.msra.mxu0 0.0
  %1672 = vmatprep.subr.mxu0 0.0
  %1673 = vmatpush1.msra.mxu0 0.0
  %1674 = vmatprep.subr.mxu0 0.0
  %1675 = vmatpush1.msra.mxu0 0.0
  %1676 = vmatprep.subr.mxu0 0.0
  %1677 = vmatpush1.msra.mxu0 0.0
  %1678 = vmatprep.subr.mxu0 0.0
  %1679 = vmatpush1.msra.mxu0 0.0
  %1680 = vmatprep.subr.mxu0 0.0
  %1681 = vmatpush1.msra.mxu0 0.0
  %1682 = vmatprep.subr.mxu0 0.0
  %1683 = vmatpush1.msra.mxu0 0.0
  %1684 = vmatprep.subr.mxu0 0.0
  %1685 = vmatpush1.msra.mxu0 0.0
  %1686 = vmatprep.subr.mxu0 0.0
  %1687 = vmatpush1.msra.mxu0 0.0
  %1688 = vmatprep.subr.mxu0 0.0
  %1689 = vmatpush1.msra.mxu0 0.0
  %1690 = vmatprep.subr.mxu0 0.0
  %1691 = vmatpush1.msra.mxu0 0.0
  %1692 = vmatprep.subr.mxu0 0.0
  %v1693 = vand.u32 %v1309, 4294901760
  %v1694 = vsub.f32 %v1309, %v1693
  %v1695 = vand.u32 %v1694, 4294901760
  %1696 = vmatpush1.msra.mxu0 %v1695
  %1697 = vmatprep.subr.mxu0 0.0
  %1698 = vmatpush2.msra.mxu0 0.0
  %1699 = vmatprep.subr.mxu0 0.0
  %1700 = vmatpush2.msra.mxu0 0.0
  %1701 = vmatprep.subr.mxu0 0.0
  %1702 = vmatpush2.msra.mxu0 0.0
  %1703 = vmatprep.subr.mxu0 0.0
  %1704 = vmatpush2.msra.mxu0 0.0
  %1705 = vmatprep.subr.mxu0 0.0
  %1706 = vmatpush2.msra.mxu0 0.0
  %1707 = vmatprep.subr.mxu0 0.0
  %1708 = vmatpush2.msra.mxu0 0.0
  %1709 = vmatprep.subr.mxu0 0.0
  %1710 = vmatpush2.msra.mxu0 0.0
  %1711 = vmatprep.subr.mxu0 0.0
  %1712 = vmatpush2.msra.mxu0 0.0
  %1713 = vmatprep.subr.mxu0 0.0
  %1714 = vmatpush2.msra.mxu0 0.0
  %1715 = vmatprep.subr.mxu0 0.0
  %1716 = vmatpush2.msra.mxu0 0.0
  %1717 = vmatprep.subr.mxu0 0.0
  %1718 = vmatpush2.msra.mxu0 0.0
  %1719 = vmatprep.subr.mxu0 0.0
  %1720 = vmatpush2.msra.mxu0 0.0
  %1721 = vmatprep.subr.mxu0 0.0
  %1722 = vmatpush2.msra.mxu0 0.0
  %1723 = vmatprep.subr.mxu0 0.0
  %1724 = vmatpush2.msra.mxu0 0.0
  %1725 = vmatprep.subr.mxu0 0.0
  %1726 = vmatpush2.msra.mxu0 0.0
  %1727 = vmatprep.subr.mxu0 0.0
  %1728 = vmatpush2.msra.mxu0 0.0
  %1729 = vmatprep.mubr.f32.mxu0 0.0
  %v1730 = vand.u32 %v1326, 4294901760
  %1731 = vmatmul.mubr.f32.gmra.mxu0 %v1730
  %v1732 = vpop.f32.mrf.mxu0
  %v1733 = vadd.f32 %v1651, %v1732
  %v1734 = vpop.f32.mrf.mxu0
  %1735 = vmatprep.mubr.f32.mxu0 0.0
  %v1736 = vand.u32 %v1329, 4294901760
  %1737 = vmatmul.mubr.f32.gmra.mxu0 %v1736
  %v1738 = vpop.f32.mrf.mxu0
  %v1739 = vadd.f32 %v1659, %v1738
  %v1740 = vpop.f32.mrf.mxu0
  %1741 = vdwg.mxu0
  %1742 = vmatprep.subr.mxu0 0.0
  %1743 = vmatpush1.msra.mxu0 0.0
  %1744 = vmatprep.subr.mxu0 0.0
  %1745 = vmatpush1.msra.mxu0 0.0
  %1746 = vmatprep.subr.mxu0 0.0
  %1747 = vmatpush1.msra.mxu0 0.0
  %1748 = vmatprep.subr.mxu0 0.0
  %1749 = vmatpush1.msra.mxu0 0.0
  %1750 = vmatprep.subr.mxu0 0.0
  %1751 = vmatpush1.msra.mxu0 0.0
  %1752 = vmatprep.subr.mxu0 0.0
  %1753 = vmatpush1.msra.mxu0 0.0
  %1754 = vmatprep.subr.mxu0 0.0
  %1755 = vmatpush1.msra.mxu0 0.0
  %1756 = vmatprep.subr.mxu0 0.0
  %1757 = vmatpush1.msra.mxu0 0.0
  %1758 = vmatprep.subr.mxu0 0.0
  %1759 = vmatpush1.msra.mxu0 0.0
  %1760 = vmatprep.subr.mxu0 0.0
  %1761 = vmatpush1.msra.mxu0 0.0
  %1762 = vmatprep.subr.mxu0 0.0
  %1763 = vmatpush1.msra.mxu0 0.0
  %1764 = vmatprep.subr.mxu0 0.0
  %1765 = vmatpush1.msra.mxu0 0.0
  %1766 = vmatprep.subr.mxu0 0.0
  %1767 = vmatpush1.msra.mxu0 0.0
  %1768 = vmatprep.subr.mxu0 0.0
  %1769 = vmatpush1.msra.mxu0 0.0
  %1770 = vmatprep.subr.mxu0 0.0
  %1771 = vmatpush1.msra.mxu0 0.0
  %1772 = vmatprep.subr.mxu0 0.0
  %v1773 = vand.u32 %v1309, 4294901760
  %1774 = vmatpush1.msra.mxu0 %v1773
  %1775 = vmatprep.subr.mxu0 0.0
  %1776 = vmatpush2.msra.mxu0 0.0
  %1777 = vmatprep.subr.mxu0 0.0
  %1778 = vmatpush2.msra.mxu0 0.0
  %1779 = vmatprep.subr.mxu0 0.0
  %1780 = vmatpush2.msra.mxu0 0.0
  %1781 = vmatprep.subr.mxu0 0.0
  %1782 = vmatpush2.msra.mxu0 0.0
  %1783 = vmatprep.subr.mxu0 0.0
  %1784 = vmatpush2.msra.mxu0 0.0
  %1785 = vmatprep.subr.mxu0 0.0
  %1786 = vmatpush2.msra.mxu0 0.0
  %1787 = vmatprep.subr.mxu0 0.0
  %1788 = vmatpush2.msra.mxu0 0.0
  %1789 = vmatprep.subr.mxu0 0.0
  %1790 = vmatpush2.msra.mxu0 0.0
  %1791 = vmatprep.subr.mxu0 0.0
  %1792 = vmatpush2.msra.mxu0 0.0
  %1793 = vmatprep.subr.mxu0 0.0
  %1794 = vmatpush2.msra.mxu0 0.0
  %1795 = vmatprep.subr.mxu0 0.0
  %1796 = vmatpush2.msra.mxu0 0.0
  %1797 = vmatprep.subr.mxu0 0.0
  %1798 = vmatpush2.msra.mxu0 0.0
  %1799 = vmatprep.subr.mxu0 0.0
  %1800 = vmatpush2.msra.mxu0 0.0
  %1801 = vmatprep.subr.mxu0 0.0
  %1802 = vmatpush2.msra.mxu0 0.0
  %1803 = vmatprep.subr.mxu0 0.0
  %1804 = vmatpush2.msra.mxu0 0.0
  %1805 = vmatprep.subr.mxu0 0.0
  %1806 = vmatpush2.msra.mxu0 0.0
  %1807 = vmatprep.mubr.f32.mxu0 0.0
  %v1808 = vand.u32 %v1326, 4294901760
  %1809 = vmatmul.mubr.f32.gmra.mxu0 %v1808
  %v1810 = vpop.f32.mrf.mxu0
  %v1811 = vadd.f32 %v1733, %v1810
  %v1812 = vpop.f32.mrf.mxu0
  %1813 = vmatprep.mubr.f32.mxu0 0.0
  %v1814 = vand.u32 %v1329, 4294901760
  %1815 = vmatmul.mubr.f32.gmra.mxu0 %v1814
  %v1816 = vpop.f32.mrf.mxu0
  %v1817 = vadd.f32 %v1739, %v1816
  %v1818 = vpop.f32.mrf.mxu0
  %1819 = vdwg.mxu0
  %1820 = vst [vmem:[%s7] sm:$0xff] %v1811
  %1821 = vst [vmem:[%s7 + $0x8] sm:$0xff] %v1817
  // Predicated region
  $region30: #{unet_block_forward.1} parent=0 // pred_check
    _
  $region31: #{unet_block_forward.1} parent=0 // pred_check_branch
    %1823 = sbr.rel (0) target = $region33
  $region32: #{unet_block_forward.1} parent=0 // pred_region
    _
  $region33: #{unet_block_forward.1} parent=0 // pred_fallthru
    _
  // Predicated region
  $region34: #{unet_block_forward.1} parent=0 // pred_check
    _
  $region35: #{unet_block_forward.1} parent=0 // pred_check_branch
    %1825 = sbr.rel (0) target = $region37
  $region36: #{unet_block_forward.1} parent=0 // pred_region
    _
  $region37: #{unet_block_forward.1} parent=0 // pred_fallthru
    _

</llo_original>
